<compile_context>
chip_gen: v7x
topology: tpu7x:2x2x1
jax: 0.10.0
libtpu: 0.0.40
codegen_flags: <defaults>
</compile_context>

<pallas_src>
import jax
import jax.numpy as jnp
from jax.experimental import pallas as pl
from jax.experimental.pallas import tpu as pltpu

HIDDEN = 256   # hidden_size (matches the PyTorch module; fills 256-deep MXU)
VOCAB = 32     # input_size (vocabulary) -- small stand-in
SEQ = 8        # encoder steps run inside the single kernel launch


def encoder_gru_kernel(x_ref,      # VMEM (SEQ, H) f32 : pre-gathered embeddings
                       h0_ref,     # VMEM (1, H)   f32 : initial hidden
                       w_ih_ref,   # VMEM (H, 3H)  bf16: W_ih^T, gate order [r|z|n]
                       w_hh_ref,   # VMEM (H, 3H)  bf16: W_hh^T, gate order [r|z|n]
                       b_ref,      # VMEM (1, 4H)  f32 : [b_r_sum|b_z_sum|b_in|b_hn]
                       out_ref):   # VMEM (SEQ, H) f32 : all hidden states
    H = HIDDEN

    # Hoisted non-recurrent projection: one M=SEQ MXU call instead of SEQ
    # M=1 calls on the serial path.
    a_i = jnp.dot(x_ref[...].astype(jnp.bfloat16), w_ih_ref[...],
                  preferred_element_type=jnp.float32)            # (SEQ, 3H) f32

    w_hh = w_hh_ref[...]
    b = b_ref[...]
    b_rz = b[:, 0:2 * H]
    b_in = b[:, 2 * H:3 * H]
    b_hn = b[:, 3 * H:4 * H]

    h = h0_ref[...]                                              # (1, H) f32, in vregs
    rows = []
    # SEQ is a compile-time constant -> fully unrolled, all slices static.
    for t in range(SEQ):
        # Only the recurrent half stays on the serial path.
        a_h = jnp.dot(h.astype(jnp.bfloat16), w_hh,
                      preferred_element_type=jnp.float32)        # (1, 3H) f32
        a_i_t = a_i[t:t + 1, :]
        # torch.nn.GRU cell, gate order [r | z | n]; r/z biases pre-summed.
        rz = jax.nn.sigmoid(a_i_t[:, 0:2 * H] + a_h[:, 0:2 * H] + b_rz)
        r = rz[:, 0:H]
        z = rz[:, H:2 * H]
        n = jnp.tanh(a_i_t[:, 2 * H:3 * H] + b_in
                     + r * (a_h[:, 2 * H:3 * H] + b_hn))
        h = (1.0 - z) * n + z * h                                # (1, H) f32
        rows.append(h)

    # Single unmasked (SEQ, H) store; no per-step masked vst.
    out_ref[...] = jnp.concatenate(rows, axis=0)


def encoder_rnn_forward(tokens, hidden, params):
    """EncoderRNN.forward threaded over a whole token sequence, one pallas_call.

    tokens: (seq_len,) int; hidden: (1, 1, H) f32.
    Returns (outputs, hidden_final): outputs (seq_len, 1, H), hidden_final
    (1, 1, H) -- identical to calling the PyTorch forward once per token while
    threading the hidden state (output_t == hidden_t for a 1-layer GRU).
    """
    # TODO(synk): for real throughput, batch sequences into M (carry a (B, H)
    # hidden, shard a batch grid axis across TensorCores); the module's
    # forward is strictly batch-1, so that is out of scope here.
    emb, w_ih_t, w_hh_t, b_fused = params
    seq_len = tokens.shape[0]
    tok = jnp.clip(jnp.asarray(tokens, jnp.int32), 0, VOCAB - 1)   # guard OOB gather
    x_emb = jnp.take(emb, tok, axis=0)                             # (seq, H) pre-gather
    h0 = hidden.reshape(1, HIDDEN).astype(jnp.float32)

    vmem = pl.BlockSpec(memory_space=pltpu.MemorySpace.VMEM)
    outs = pl.pallas_call(
        encoder_gru_kernel,
        out_shape=jax.ShapeDtypeStruct((seq_len, HIDDEN), jnp.float32),
        in_specs=[vmem, vmem, vmem, vmem, vmem],
        out_specs=vmem,
    )(x_emb, h0, w_ih_t, w_hh_t, b_fused)

    outputs = outs.reshape(seq_len, 1, HIDDEN)
    hidden_final = outs[seq_len - 1].reshape(1, 1, HIDDEN)
    return outputs, hidden_final


def make_params(key):
    """Build EncoderRNN parameters and repack them into the kernel layout."""
    k_emb, k_wi, k_wh, k_bi, k_bh = jax.random.split(key, 5)
    H = HIDDEN
    scale = 1.0 / jnp.sqrt(H)
    emb = jax.random.normal(k_emb, (VOCAB, H), jnp.float32)                  # nn.Embedding
    # torch weight_ih_l0 / weight_hh_l0 are (3H, H); the kernel keeps transposes.
    w_ih_t = jax.random.uniform(k_wi, (H, 3 * H), jnp.float32, -scale, scale)
    w_hh_t = jax.random.uniform(k_wh, (H, 3 * H), jnp.float32, -scale, scale)
    b_ih = jax.random.uniform(k_bi, (1, 3 * H), jnp.float32, -scale, scale)
    b_hh = jax.random.uniform(k_bh, (1, 3 * H), jnp.float32, -scale, scale)
    # Kernel bias layout: [b_ir+b_hr | b_iz+b_hz | b_in | b_hn]
    # (n-gate biases must stay split because b_hn is gated by r).
    b_fused = jnp.concatenate(
        [b_ih[:, 0:2 * H] + b_hh[:, 0:2 * H],
         b_ih[:, 2 * H:3 * H],
         b_hh[:, 2 * H:3 * H]], axis=1)
    return (emb,
            w_ih_t.astype(jnp.bfloat16),
            w_hh_t.astype(jnp.bfloat16),
            b_fused)


def reference_forward(tokens, hidden, params):
    """Pure-JAX EncoderRNN.forward applied step by step (same numerics as kernel)."""
    emb, w_ih_t, w_hh_t, b = params
    H = HIDDEN
    tok = jnp.clip(jnp.asarray(tokens, jnp.int32), 0, VOCAB - 1)
    h = hidden.reshape(1, H).astype(jnp.float32)
    outs = []
    for i in range(tokens.shape[0]):
        x = emb[tok[i]].reshape(1, H)
        a_i = jnp.dot(x.astype(jnp.bfloat16), w_ih_t,
                      preferred_element_type=jnp.float32)
        a_h = jnp.dot(h.astype(jnp.bfloat16), w_hh_t,
                      preferred_element_type=jnp.float32)
        rz = jax.nn.sigmoid(a_i[:, 0:2 * H] + a_h[:, 0:2 * H] + b[:, 0:2 * H])
        r, z = rz[:, 0:H], rz[:, H:2 * H]
        n = jnp.tanh(a_i[:, 2 * H:3 * H] + b[:, 2 * H:3 * H]
                     + r * (a_h[:, 2 * H:3 * H] + b[:, 3 * H:4 * H]))
        h = (1.0 - z) * n + z * h
        outs.append(h)
    outputs = jnp.stack(outs, axis=0)                    # (seq, 1, H)
    return outputs, h.reshape(1, 1, H)


if __name__ == "__main__":
    key = jax.random.PRNGKey(0)
    k_params, k_tok = jax.random.split(key)
    params = make_params(k_params)

    tokens = jax.random.randint(k_tok, (SEQ,), 0, VOCAB, dtype=jnp.int32)
    hidden0 = jnp.zeros((1, 1, HIDDEN), jnp.float32)     # EncoderRNN.initHidden()

    fwd = jax.jit(encoder_rnn_forward)
    outputs, h_final = fwd(tokens, hidden0, params)
    outputs, h_final = jax.block_until_ready((outputs, h_final))

    ref_out, ref_h = reference_forward(tokens, hidden0, params)
    assert outputs.shape == (SEQ, 1, HIDDEN) and h_final.shape == (1, 1, HIDDEN)
    assert jnp.allclose(outputs, ref_out, atol=2e-4, rtol=2e-4)
    assert jnp.allclose(h_final, ref_h, atol=2e-4, rtol=2e-4)

    print("KERNEL_OK")
</pallas_src>

<mosaic_0001>
module attributes {stable_mosaic.version = 11 : i64} {
  func.func @encoder_gru_kernel(%arg0: memref<8x256xf32, #tpu.memory_space<vmem>>, %arg1: memref<1x256xf32, #tpu.memory_space<vmem>>, %arg2: memref<256x768xbf16, #tpu.memory_space<vmem>>, %arg3: memref<256x768xbf16, #tpu.memory_space<vmem>>, %arg4: memref<1x1024xf32, #tpu.memory_space<vmem>>, %arg5: memref<8x256xf32, #tpu.memory_space<vmem>>) attributes {dimension_semantics = [], scalar_prefetch = 0 : i64, scratch_operands = 0 : i64, tpu.core_type = #tpu.core_type<tc>} {
    %c0 = arith.constant 0 : index
    %c0_0 = arith.constant 0 : index
    %0 = vector.load %arg0[%c0, %c0_0] : memref<8x256xf32, #tpu.memory_space<vmem>>, vector<8x256xf32>
    %1 = arith.truncf %0 : vector<8x256xf32> to vector<8x256xbf16>
    %c0_1 = arith.constant 0 : index
    %c0_2 = arith.constant 0 : index
    %2 = vector.load %arg2[%c0_1, %c0_2] : memref<256x768xbf16, #tpu.memory_space<vmem>>, vector<256x768xbf16>
    %cst = arith.constant dense<0.000000e+00> : vector<8x768xf32>
    %3 = tpu.matmul %1, %2, %cst {dimension_numbers = #tpu.dot_dimension_numbers<[1], [0], [0], [1], [0, 0, 1, 1], [], []>} : vector<8x256xbf16>, vector<256x768xbf16>, vector<8x768xf32> -> vector<8x768xf32>
    %c0_3 = arith.constant 0 : index
    %c0_4 = arith.constant 0 : index
    %4 = vector.load %arg3[%c0_3, %c0_4] : memref<256x768xbf16, #tpu.memory_space<vmem>>, vector<256x768xbf16>
    %c0_5 = arith.constant 0 : index
    %c0_6 = arith.constant 0 : index
    %5 = vector.load %arg4[%c0_5, %c0_6] : memref<1x1024xf32, #tpu.memory_space<vmem>>, vector<1x1024xf32>
    %6 = vector.extract_strided_slice %5 {offsets = [0, 0], sizes = [1, 512], strides = [1, 1]} : vector<1x1024xf32> to vector<1x512xf32>
    %7 = vector.extract_strided_slice %5 {offsets = [0, 512], sizes = [1, 256], strides = [1, 1]} : vector<1x1024xf32> to vector<1x256xf32>
    %8 = vector.extract_strided_slice %5 {offsets = [0, 768], sizes = [1, 256], strides = [1, 1]} : vector<1x1024xf32> to vector<1x256xf32>
    %c0_7 = arith.constant 0 : index
    %c0_8 = arith.constant 0 : index
    %9 = vector.load %arg1[%c0_7, %c0_8] : memref<1x256xf32, #tpu.memory_space<vmem>>, vector<1x256xf32>
    %10 = arith.truncf %9 : vector<1x256xf32> to vector<1x256xbf16>
    %cst_9 = arith.constant dense<0.000000e+00> : vector<1x768xf32>
    %11 = tpu.matmul %10, %4, %cst_9 {dimension_numbers = #tpu.dot_dimension_numbers<[1], [0], [0], [1], [0, 0, 1, 1], [], []>} : vector<1x256xbf16>, vector<256x768xbf16>, vector<1x768xf32> -> vector<1x768xf32>
    %12 = vector.extract_strided_slice %3 {offsets = [0, 0], sizes = [1, 768], strides = [1, 1]} : vector<8x768xf32> to vector<1x768xf32>
    %13 = vector.extract_strided_slice %12 {offsets = [0, 0], sizes = [1, 512], strides = [1, 1]} : vector<1x768xf32> to vector<1x512xf32>
    %14 = vector.extract_strided_slice %11 {offsets = [0, 0], sizes = [1, 512], strides = [1, 1]} : vector<1x768xf32> to vector<1x512xf32>
    %15 = arith.addf %13, %14 : vector<1x512xf32>
    %16 = arith.addf %15, %6 : vector<1x512xf32>
    %17 = arith.negf %16 : vector<1x512xf32>
    %18 = math.exp %17 : vector<1x512xf32>
    %cst_10 = arith.constant 1.000000e+00 : f32
    %19 = vector.broadcast %cst_10 : f32 to vector<1x512xf32>
    %20 = arith.addf %19, %18 : vector<1x512xf32>
    %21 = arith.divf %19, %20 : vector<1x512xf32>
    %22 = vector.extract_strided_slice %21 {offsets = [0, 0], sizes = [1, 256], strides = [1, 1]} : vector<1x512xf32> to vector<1x256xf32>
    %23 = vector.extract_strided_slice %21 {offsets = [0, 256], sizes = [1, 256], strides = [1, 1]} : vector<1x512xf32> to vector<1x256xf32>
    %24 = vector.extract_strided_slice %12 {offsets = [0, 512], sizes = [1, 256], strides = [1, 1]} : vector<1x768xf32> to vector<1x256xf32>
    %25 = arith.addf %24, %7 : vector<1x256xf32>
    %26 = vector.extract_strided_slice %11 {offsets = [0, 512], sizes = [1, 256], strides = [1, 1]} : vector<1x768xf32> to vector<1x256xf32>
    %27 = arith.addf %26, %8 : vector<1x256xf32>
    %28 = arith.mulf %22, %27 : vector<1x256xf32>
    %29 = arith.addf %25, %28 : vector<1x256xf32>
    %30 = math.tanh %29 : vector<1x256xf32>
    %cst_11 = arith.constant 1.000000e+00 : f32
    %31 = vector.broadcast %cst_11 : f32 to vector<1x256xf32>
    %32 = arith.subf %31, %23 : vector<1x256xf32>
    %33 = arith.mulf %32, %30 : vector<1x256xf32>
    %34 = arith.mulf %23, %9 : vector<1x256xf32>
    %35 = arith.addf %33, %34 : vector<1x256xf32>
    %36 = arith.truncf %35 : vector<1x256xf32> to vector<1x256xbf16>
    %cst_12 = arith.constant dense<0.000000e+00> : vector<1x768xf32>
    %37 = tpu.matmul %36, %4, %cst_12 {dimension_numbers = #tpu.dot_dimension_numbers<[1], [0], [0], [1], [0, 0, 1, 1], [], []>} : vector<1x256xbf16>, vector<256x768xbf16>, vector<1x768xf32> -> vector<1x768xf32>
    %38 = vector.extract_strided_slice %3 {offsets = [1, 0], sizes = [1, 768], strides = [1, 1]} : vector<8x768xf32> to vector<1x768xf32>
    %39 = vector.extract_strided_slice %38 {offsets = [0, 0], sizes = [1, 512], strides = [1, 1]} : vector<1x768xf32> to vector<1x512xf32>
    %40 = vector.extract_strided_slice %37 {offsets = [0, 0], sizes = [1, 512], strides = [1, 1]} : vector<1x768xf32> to vector<1x512xf32>
    %41 = arith.addf %39, %40 : vector<1x512xf32>
    %42 = arith.addf %41, %6 : vector<1x512xf32>
    %43 = arith.negf %42 : vector<1x512xf32>
    %44 = math.exp %43 : vector<1x512xf32>
    %cst_13 = arith.constant 1.000000e+00 : f32
    %45 = vector.broadcast %cst_13 : f32 to vector<1x512xf32>
    %46 = arith.addf %45, %44 : vector<1x512xf32>
    %47 = arith.divf %45, %46 : vector<1x512xf32>
    %48 = vector.extract_strided_slice %47 {offsets = [0, 0], sizes = [1, 256], strides = [1, 1]} : vector<1x512xf32> to vector<1x256xf32>
    %49 = vector.extract_strided_slice %47 {offsets = [0, 256], sizes = [1, 256], strides = [1, 1]} : vector<1x512xf32> to vector<1x256xf32>
    %50 = vector.extract_strided_slice %38 {offsets = [0, 512], sizes = [1, 256], strides = [1, 1]} : vector<1x768xf32> to vector<1x256xf32>
    %51 = arith.addf %50, %7 : vector<1x256xf32>
    %52 = vector.extract_strided_slice %37 {offsets = [0, 512], sizes = [1, 256], strides = [1, 1]} : vector<1x768xf32> to vector<1x256xf32>
    %53 = arith.addf %52, %8 : vector<1x256xf32>
    %54 = arith.mulf %48, %53 : vector<1x256xf32>
    %55 = arith.addf %51, %54 : vector<1x256xf32>
    %56 = math.tanh %55 : vector<1x256xf32>
    %cst_14 = arith.constant 1.000000e+00 : f32
    %57 = vector.broadcast %cst_14 : f32 to vector<1x256xf32>
    %58 = arith.subf %57, %49 : vector<1x256xf32>
    %59 = arith.mulf %58, %56 : vector<1x256xf32>
    %60 = arith.mulf %49, %35 : vector<1x256xf32>
    %61 = arith.addf %59, %60 : vector<1x256xf32>
    %62 = arith.truncf %61 : vector<1x256xf32> to vector<1x256xbf16>
    %cst_15 = arith.constant dense<0.000000e+00> : vector<1x768xf32>
    %63 = tpu.matmul %62, %4, %cst_15 {dimension_numbers = #tpu.dot_dimension_numbers<[1], [0], [0], [1], [0, 0, 1, 1], [], []>} : vector<1x256xbf16>, vector<256x768xbf16>, vector<1x768xf32> -> vector<1x768xf32>
    %64 = vector.extract_strided_slice %3 {offsets = [2, 0], sizes = [1, 768], strides = [1, 1]} : vector<8x768xf32> to vector<1x768xf32>
    %65 = vector.extract_strided_slice %64 {offsets = [0, 0], sizes = [1, 512], strides = [1, 1]} : vector<1x768xf32> to vector<1x512xf32>
    %66 = vector.extract_strided_slice %63 {offsets = [0, 0], sizes = [1, 512], strides = [1, 1]} : vector<1x768xf32> to vector<1x512xf32>
    %67 = arith.addf %65, %66 : vector<1x512xf32>
    %68 = arith.addf %67, %6 : vector<1x512xf32>
    %69 = arith.negf %68 : vector<1x512xf32>
    %70 = math.exp %69 : vector<1x512xf32>
    %cst_16 = arith.constant 1.000000e+00 : f32
    %71 = vector.broadcast %cst_16 : f32 to vector<1x512xf32>
    %72 = arith.addf %71, %70 : vector<1x512xf32>
    %73 = arith.divf %71, %72 : vector<1x512xf32>
    %74 = vector.extract_strided_slice %73 {offsets = [0, 0], sizes = [1, 256], strides = [1, 1]} : vector<1x512xf32> to vector<1x256xf32>
    %75 = vector.extract_strided_slice %73 {offsets = [0, 256], sizes = [1, 256], strides = [1, 1]} : vector<1x512xf32> to vector<1x256xf32>
    %76 = vector.extract_strided_slice %64 {offsets = [0, 512], sizes = [1, 256], strides = [1, 1]} : vector<1x768xf32> to vector<1x256xf32>
    %77 = arith.addf %76, %7 : vector<1x256xf32>
    %78 = vector.extract_strided_slice %63 {offsets = [0, 512], sizes = [1, 256], strides = [1, 1]} : vector<1x768xf32> to vector<1x256xf32>
    %79 = arith.addf %78, %8 : vector<1x256xf32>
    %80 = arith.mulf %74, %79 : vector<1x256xf32>
    %81 = arith.addf %77, %80 : vector<1x256xf32>
    %82 = math.tanh %81 : vector<1x256xf32>
    %cst_17 = arith.constant 1.000000e+00 : f32
    %83 = vector.broadcast %cst_17 : f32 to vector<1x256xf32>
    %84 = arith.subf %83, %75 : vector<1x256xf32>
    %85 = arith.mulf %84, %82 : vector<1x256xf32>
    %86 = arith.mulf %75, %61 : vector<1x256xf32>
    %87 = arith.addf %85, %86 : vector<1x256xf32>
    %88 = arith.truncf %87 : vector<1x256xf32> to vector<1x256xbf16>
    %cst_18 = arith.constant dense<0.000000e+00> : vector<1x768xf32>
    %89 = tpu.matmul %88, %4, %cst_18 {dimension_numbers = #tpu.dot_dimension_numbers<[1], [0], [0], [1], [0, 0, 1, 1], [], []>} : vector<1x256xbf16>, vector<256x768xbf16>, vector<1x768xf32> -> vector<1x768xf32>
    %90 = vector.extract_strided_slice %3 {offsets = [3, 0], sizes = [1, 768], strides = [1, 1]} : vector<8x768xf32> to vector<1x768xf32>
    %91 = vector.extract_strided_slice %90 {offsets = [0, 0], sizes = [1, 512], strides = [1, 1]} : vector<1x768xf32> to vector<1x512xf32>
    %92 = vector.extract_strided_slice %89 {offsets = [0, 0], sizes = [1, 512], strides = [1, 1]} : vector<1x768xf32> to vector<1x512xf32>
    %93 = arith.addf %91, %92 : vector<1x512xf32>
    %94 = arith.addf %93, %6 : vector<1x512xf32>
    %95 = arith.negf %94 : vector<1x512xf32>
    %96 = math.exp %95 : vector<1x512xf32>
    %cst_19 = arith.constant 1.000000e+00 : f32
    %97 = vector.broadcast %cst_19 : f32 to vector<1x512xf32>
    %98 = arith.addf %97, %96 : vector<1x512xf32>
    %99 = arith.divf %97, %98 : vector<1x512xf32>
    %100 = vector.extract_strided_slice %99 {offsets = [0, 0], sizes = [1, 256], strides = [1, 1]} : vector<1x512xf32> to vector<1x256xf32>
    %101 = vector.extract_strided_slice %99 {offsets = [0, 256], sizes = [1, 256], strides = [1, 1]} : vector<1x512xf32> to vector<1x256xf32>
    %102 = vector.extract_strided_slice %90 {offsets = [0, 512], sizes = [1, 256], strides = [1, 1]} : vector<1x768xf32> to vector<1x256xf32>
    %103 = arith.addf %102, %7 : vector<1x256xf32>
    %104 = vector.extract_strided_slice %89 {offsets = [0, 512], sizes = [1, 256], strides = [1, 1]} : vector<1x768xf32> to vector<1x256xf32>
    %105 = arith.addf %104, %8 : vector<1x256xf32>
    %106 = arith.mulf %100, %105 : vector<1x256xf32>
    %107 = arith.addf %103, %106 : vector<1x256xf32>
    %108 = math.tanh %107 : vector<1x256xf32>
    %cst_20 = arith.constant 1.000000e+00 : f32
    %109 = vector.broadcast %cst_20 : f32 to vector<1x256xf32>
    %110 = arith.subf %109, %101 : vector<1x256xf32>
    %111 = arith.mulf %110, %108 : vector<1x256xf32>
    %112 = arith.mulf %101, %87 : vector<1x256xf32>
    %113 = arith.addf %111, %112 : vector<1x256xf32>
    %114 = arith.truncf %113 : vector<1x256xf32> to vector<1x256xbf16>
    %cst_21 = arith.constant dense<0.000000e+00> : vector<1x768xf32>
    %115 = tpu.matmul %114, %4, %cst_21 {dimension_numbers = #tpu.dot_dimension_numbers<[1], [0], [0], [1], [0, 0, 1, 1], [], []>} : vector<1x256xbf16>, vector<256x768xbf16>, vector<1x768xf32> -> vector<1x768xf32>
    %116 = vector.extract_strided_slice %3 {offsets = [4, 0], sizes = [1, 768], strides = [1, 1]} : vector<8x768xf32> to vector<1x768xf32>
    %117 = vector.extract_strided_slice %116 {offsets = [0, 0], sizes = [1, 512], strides = [1, 1]} : vector<1x768xf32> to vector<1x512xf32>
    %118 = vector.extract_strided_slice %115 {offsets = [0, 0], sizes = [1, 512], strides = [1, 1]} : vector<1x768xf32> to vector<1x512xf32>
    %119 = arith.addf %117, %118 : vector<1x512xf32>
    %120 = arith.addf %119, %6 : vector<1x512xf32>
    %121 = arith.negf %120 : vector<1x512xf32>
    %122 = math.exp %121 : vector<1x512xf32>
    %cst_22 = arith.constant 1.000000e+00 : f32
    %123 = vector.broadcast %cst_22 : f32 to vector<1x512xf32>
    %124 = arith.addf %123, %122 : vector<1x512xf32>
    %125 = arith.divf %123, %124 : vector<1x512xf32>
    %126 = vector.extract_strided_slice %125 {offsets = [0, 0], sizes = [1, 256], strides = [1, 1]} : vector<1x512xf32> to vector<1x256xf32>
    %127 = vector.extract_strided_slice %125 {offsets = [0, 256], sizes = [1, 256], strides = [1, 1]} : vector<1x512xf32> to vector<1x256xf32>
    %128 = vector.extract_strided_slice %116 {offsets = [0, 512], sizes = [1, 256], strides = [1, 1]} : vector<1x768xf32> to vector<1x256xf32>
    %129 = arith.addf %128, %7 : vector<1x256xf32>
    %130 = vector.extract_strided_slice %115 {offsets = [0, 512], sizes = [1, 256], strides = [1, 1]} : vector<1x768xf32> to vector<1x256xf32>
    %131 = arith.addf %130, %8 : vector<1x256xf32>
    %132 = arith.mulf %126, %131 : vector<1x256xf32>
    %133 = arith.addf %129, %132 : vector<1x256xf32>
    %134 = math.tanh %133 : vector<1x256xf32>
    %cst_23 = arith.constant 1.000000e+00 : f32
    %135 = vector.broadcast %cst_23 : f32 to vector<1x256xf32>
    %136 = arith.subf %135, %127 : vector<1x256xf32>
    %137 = arith.mulf %136, %134 : vector<1x256xf32>
    %138 = arith.mulf %127, %113 : vector<1x256xf32>
    %139 = arith.addf %137, %138 : vector<1x256xf32>
    %140 = arith.truncf %139 : vector<1x256xf32> to vector<1x256xbf16>
    %cst_24 = arith.constant dense<0.000000e+00> : vector<1x768xf32>
    %141 = tpu.matmul %140, %4, %cst_24 {dimension_numbers = #tpu.dot_dimension_numbers<[1], [0], [0], [1], [0, 0, 1, 1], [], []>} : vector<1x256xbf16>, vector<256x768xbf16>, vector<1x768xf32> -> vector<1x768xf32>
    %142 = vector.extract_strided_slice %3 {offsets = [5, 0], sizes = [1, 768], strides = [1, 1]} : vector<8x768xf32> to vector<1x768xf32>
    %143 = vector.extract_strided_slice %142 {offsets = [0, 0], sizes = [1, 512], strides = [1, 1]} : vector<1x768xf32> to vector<1x512xf32>
    %144 = vector.extract_strided_slice %141 {offsets = [0, 0], sizes = [1, 512], strides = [1, 1]} : vector<1x768xf32> to vector<1x512xf32>
    %145 = arith.addf %143, %144 : vector<1x512xf32>
    %146 = arith.addf %145, %6 : vector<1x512xf32>
    %147 = arith.negf %146 : vector<1x512xf32>
    %148 = math.exp %147 : vector<1x512xf32>
    %cst_25 = arith.constant 1.000000e+00 : f32
    %149 = vector.broadcast %cst_25 : f32 to vector<1x512xf32>
    %150 = arith.addf %149, %148 : vector<1x512xf32>
    %151 = arith.divf %149, %150 : vector<1x512xf32>
    %152 = vector.extract_strided_slice %151 {offsets = [0, 0], sizes = [1, 256], strides = [1, 1]} : vector<1x512xf32> to vector<1x256xf32>
    %153 = vector.extract_strided_slice %151 {offsets = [0, 256], sizes = [1, 256], strides = [1, 1]} : vector<1x512xf32> to vector<1x256xf32>
    %154 = vector.extract_strided_slice %142 {offsets = [0, 512], sizes = [1, 256], strides = [1, 1]} : vector<1x768xf32> to vector<1x256xf32>
    %155 = arith.addf %154, %7 : vector<1x256xf32>
    %156 = vector.extract_strided_slice %141 {offsets = [0, 512], sizes = [1, 256], strides = [1, 1]} : vector<1x768xf32> to vector<1x256xf32>
    %157 = arith.addf %156, %8 : vector<1x256xf32>
    %158 = arith.mulf %152, %157 : vector<1x256xf32>
    %159 = arith.addf %155, %158 : vector<1x256xf32>
    %160 = math.tanh %159 : vector<1x256xf32>
    %cst_26 = arith.constant 1.000000e+00 : f32
    %161 = vector.broadcast %cst_26 : f32 to vector<1x256xf32>
    %162 = arith.subf %161, %153 : vector<1x256xf32>
    %163 = arith.mulf %162, %160 : vector<1x256xf32>
    %164 = arith.mulf %153, %139 : vector<1x256xf32>
    %165 = arith.addf %163, %164 : vector<1x256xf32>
    %166 = arith.truncf %165 : vector<1x256xf32> to vector<1x256xbf16>
    %cst_27 = arith.constant dense<0.000000e+00> : vector<1x768xf32>
    %167 = tpu.matmul %166, %4, %cst_27 {dimension_numbers = #tpu.dot_dimension_numbers<[1], [0], [0], [1], [0, 0, 1, 1], [], []>} : vector<1x256xbf16>, vector<256x768xbf16>, vector<1x768xf32> -> vector<1x768xf32>
    %168 = vector.extract_strided_slice %3 {offsets = [6, 0], sizes = [1, 768], strides = [1, 1]} : vector<8x768xf32> to vector<1x768xf32>
    %169 = vector.extract_strided_slice %168 {offsets = [0, 0], sizes = [1, 512], strides = [1, 1]} : vector<1x768xf32> to vector<1x512xf32>
    %170 = vector.extract_strided_slice %167 {offsets = [0, 0], sizes = [1, 512], strides = [1, 1]} : vector<1x768xf32> to vector<1x512xf32>
    %171 = arith.addf %169, %170 : vector<1x512xf32>
    %172 = arith.addf %171, %6 : vector<1x512xf32>
    %173 = arith.negf %172 : vector<1x512xf32>
    %174 = math.exp %173 : vector<1x512xf32>
    %cst_28 = arith.constant 1.000000e+00 : f32
    %175 = vector.broadcast %cst_28 : f32 to vector<1x512xf32>
    %176 = arith.addf %175, %174 : vector<1x512xf32>
    %177 = arith.divf %175, %176 : vector<1x512xf32>
    %178 = vector.extract_strided_slice %177 {offsets = [0, 0], sizes = [1, 256], strides = [1, 1]} : vector<1x512xf32> to vector<1x256xf32>
    %179 = vector.extract_strided_slice %177 {offsets = [0, 256], sizes = [1, 256], strides = [1, 1]} : vector<1x512xf32> to vector<1x256xf32>
    %180 = vector.extract_strided_slice %168 {offsets = [0, 512], sizes = [1, 256], strides = [1, 1]} : vector<1x768xf32> to vector<1x256xf32>
    %181 = arith.addf %180, %7 : vector<1x256xf32>
    %182 = vector.extract_strided_slice %167 {offsets = [0, 512], sizes = [1, 256], strides = [1, 1]} : vector<1x768xf32> to vector<1x256xf32>
    %183 = arith.addf %182, %8 : vector<1x256xf32>
    %184 = arith.mulf %178, %183 : vector<1x256xf32>
    %185 = arith.addf %181, %184 : vector<1x256xf32>
    %186 = math.tanh %185 : vector<1x256xf32>
    %cst_29 = arith.constant 1.000000e+00 : f32
    %187 = vector.broadcast %cst_29 : f32 to vector<1x256xf32>
    %188 = arith.subf %187, %179 : vector<1x256xf32>
    %189 = arith.mulf %188, %186 : vector<1x256xf32>
    %190 = arith.mulf %179, %165 : vector<1x256xf32>
    %191 = arith.addf %189, %190 : vector<1x256xf32>
    %192 = arith.truncf %191 : vector<1x256xf32> to vector<1x256xbf16>
    %cst_30 = arith.constant dense<0.000000e+00> : vector<1x768xf32>
    %193 = tpu.matmul %192, %4, %cst_30 {dimension_numbers = #tpu.dot_dimension_numbers<[1], [0], [0], [1], [0, 0, 1, 1], [], []>} : vector<1x256xbf16>, vector<256x768xbf16>, vector<1x768xf32> -> vector<1x768xf32>
    %194 = vector.extract_strided_slice %3 {offsets = [7, 0], sizes = [1, 768], strides = [1, 1]} : vector<8x768xf32> to vector<1x768xf32>
    %195 = vector.extract_strided_slice %194 {offsets = [0, 0], sizes = [1, 512], strides = [1, 1]} : vector<1x768xf32> to vector<1x512xf32>
    %196 = vector.extract_strided_slice %193 {offsets = [0, 0], sizes = [1, 512], strides = [1, 1]} : vector<1x768xf32> to vector<1x512xf32>
    %197 = arith.addf %195, %196 : vector<1x512xf32>
    %198 = arith.addf %197, %6 : vector<1x512xf32>
    %199 = arith.negf %198 : vector<1x512xf32>
    %200 = math.exp %199 : vector<1x512xf32>
    %cst_31 = arith.constant 1.000000e+00 : f32
    %201 = vector.broadcast %cst_31 : f32 to vector<1x512xf32>
    %202 = arith.addf %201, %200 : vector<1x512xf32>
    %203 = arith.divf %201, %202 : vector<1x512xf32>
    %204 = vector.extract_strided_slice %203 {offsets = [0, 0], sizes = [1, 256], strides = [1, 1]} : vector<1x512xf32> to vector<1x256xf32>
    %205 = vector.extract_strided_slice %203 {offsets = [0, 256], sizes = [1, 256], strides = [1, 1]} : vector<1x512xf32> to vector<1x256xf32>
    %206 = vector.extract_strided_slice %194 {offsets = [0, 512], sizes = [1, 256], strides = [1, 1]} : vector<1x768xf32> to vector<1x256xf32>
    %207 = arith.addf %206, %7 : vector<1x256xf32>
    %208 = vector.extract_strided_slice %193 {offsets = [0, 512], sizes = [1, 256], strides = [1, 1]} : vector<1x768xf32> to vector<1x256xf32>
    %209 = arith.addf %208, %8 : vector<1x256xf32>
    %210 = arith.mulf %204, %209 : vector<1x256xf32>
    %211 = arith.addf %207, %210 : vector<1x256xf32>
    %212 = math.tanh %211 : vector<1x256xf32>
    %cst_32 = arith.constant 1.000000e+00 : f32
    %213 = vector.broadcast %cst_32 : f32 to vector<1x256xf32>
    %214 = arith.subf %213, %205 : vector<1x256xf32>
    %215 = arith.mulf %214, %212 : vector<1x256xf32>
    %216 = arith.mulf %205, %191 : vector<1x256xf32>
    %217 = arith.addf %215, %216 : vector<1x256xf32>
    %218 = tpu.concatenate %35, %61, %87, %113, %139, %165, %191, %217 in 0 : vector<1x256xf32>, vector<1x256xf32>, vector<1x256xf32>, vector<1x256xf32>, vector<1x256xf32>, vector<1x256xf32>, vector<1x256xf32>, vector<1x256xf32> -> vector<8x256xf32>
    %c0_33 = arith.constant 0 : index
    %c0_34 = arith.constant 0 : index
    %219 = vector.load %arg5[%c0_33, %c0_34] : memref<8x256xf32, #tpu.memory_space<vmem>>, vector<8x256xf32>
    tpu.vector_store %arg5[%c0_33, %c0_34], %218 {strides = array<i32>} : memref<8x256xf32, #tpu.memory_space<vmem>>, vector<8x256xf32>,
    return
  }
}

</mosaic_0001>

<llo_original>
// kernel: encoder_rnn_forward.1
$region0: #{encoder_rnn_forward.1}
  #allocation0 [shape = 'u32[]', space=smem, size = 0x4, offset = 0x4, fixed_abs, tag = 'smem constant byte address 0x4 - core index']
  #allocation1 [shape = 'u32[144,128]{1,0:T(1,128)}', space=vmem, size = 0x12000, scoped, tag = 'internal scratch']
  %s0 = inlined_call_operand.vmem [shape: f32[8,256], index: 0, kind: input, shape index: {}]
  %s1 = inlined_call_operand.vmem [shape: f32[1,256], index: 1, kind: input, shape index: {}]
  %s2 = inlined_call_operand.hbm [shape: bf16[256,768], index: 2, kind: input, shape index: {}]
  %s3 = inlined_call_operand.hbm [shape: bf16[256,768], index: 3, kind: input, shape index: {}]
  %s4 = inlined_call_operand.vmem [shape: f32[1,1024], index: 4, kind: input, shape index: {}]
  %s5 = inlined_call_operand.vmem [shape: f32[8,256], index: 5, kind: output, shape index: {}]
  %s6 = sld [smem:[#allocation0]]
  $region38: #{encoder_rnn_forward.1} parent=0
    _
  %s8 = ssub.s32 1, %s6
  %s9 = scalar_select 0, %s8, %s6
  $region1: #{encoder_rnn_forward.1} parent=0
    #allocation2 [shape = 'u8[393216]{0}', space=vmem, size = 0x60000, scoped, tag = 'input window, operand 2, single buffered']
    #allocation3 [shape = 's32[1]{0}', space=sflag, size = 0x4, scoped, tag = 'scoped memory for encoder_rnn_forward.1']
    #allocation4 [shape = 'u8[393216]{0}', space=vmem, size = 0x60000, scoped, tag = 'input window, operand 3, single buffered']
    #allocation5 [shape = 's32[1]{0}', space=sflag, size = 0x4, scoped, tag = 'scoped memory for encoder_rnn_forward.1']
    %10 = vsyncpa [#allocation3], 0
    %11 = vsyncpa [#allocation5], 0
    // Predicated region
    $region2: #{encoder_rnn_forward.1} parent=1 // pred_check
      _
    $region3: #{encoder_rnn_forward.1} parent=1 // pred_check_branch
      %13 = sbr.rel (0) target = $region5
    $region4: #{encoder_rnn_forward.1} parent=1 // pred_region
      _
    $region5: #{encoder_rnn_forward.1} parent=1 // pred_fallthru
      _
    // Predicated region
    $region6: #{encoder_rnn_forward.1} parent=1 // pred_check
      _
    $region7: #{encoder_rnn_forward.1} parent=1 // pred_check_branch
      %15 = sbr.rel (0) target = $region9
    $region8: #{encoder_rnn_forward.1} parent=1 // pred_region
      _
    $region9: #{encoder_rnn_forward.1} parent=1 // pred_fallthru
      _
    // Predicated region
    $region10: #{encoder_rnn_forward.1} parent=1 // pred_check
      _
    $region11: #{encoder_rnn_forward.1} parent=1 // pred_check_branch
      %17 = sbr.rel (0) target = $region13
    $region12: #{encoder_rnn_forward.1} parent=1 // pred_region
      %s19 = ssub.s32 12288, 12288
      %20 = vsyncadd [#allocation3], %s19
      %s21 = sshll.u32 [#allocation2], 4
      %s22 = int_to_ptr.vmem [resolvable:$true] %s21
      %27 = dma.hbm_to_vmem [thread:$0]  %s2, 12288, %s22, [#allocation3], 384, 384, 24
    $region13: #{encoder_rnn_forward.1} parent=1 // pred_fallthru
      _
    // Predicated region
    $region14: #{encoder_rnn_forward.1} parent=1 // pred_check
      _
    $region15: #{encoder_rnn_forward.1} parent=1 // pred_check_branch
      %29 = sbr.rel (0) target = $region17
    $region16: #{encoder_rnn_forward.1} parent=1 // pred_region
      %s31 = ssub.s32 12288, 12288
      %32 = vsyncadd [#allocation5], %s31
      %s33 = sshll.u32 [#allocation4], 4
      %s34 = int_to_ptr.vmem [resolvable:$true] %s33
      %39 = dma.hbm_to_vmem [thread:$0]  %s3, 12288, %s34, [#allocation5], 384, 384, 24
    $region17: #{encoder_rnn_forward.1} parent=1 // pred_fallthru
      _
    // Predicated region
    $region18: #{encoder_rnn_forward.1} parent=1 // pred_check
      _
    $region19: #{encoder_rnn_forward.1} parent=1 // pred_check_branch
      %41 = sbr.rel (0) target = $region21
    $region20: #{encoder_rnn_forward.1} parent=1 // pred_region
      _
    $region21: #{encoder_rnn_forward.1} parent=1 // pred_fallthru
      _
    // Predicated region
    $region22: #{encoder_rnn_forward.1} parent=1 // pred_check
      _
    $region23: #{encoder_rnn_forward.1} parent=1 // pred_check_branch
      %43 = sbr.rel (0) target = $region25
    $region24: #{encoder_rnn_forward.1} parent=1 // pred_region
      %44 = dma.done [#allocation3], 12288
    $region25: #{encoder_rnn_forward.1} parent=1 // pred_fallthru
      _
    // Predicated region
    $region26: #{encoder_rnn_forward.1} parent=1 // pred_check
      _
    $region27: #{encoder_rnn_forward.1} parent=1 // pred_check_branch
      %46 = sbr.rel (0) target = $region29
    $region28: #{encoder_rnn_forward.1} parent=1 // pred_region
      %47 = dma.done [#allocation5], 12288
    $region29: #{encoder_rnn_forward.1} parent=1 // pred_fallthru
      _
    %v48 = vld [vmem:[%s0] sm:$0xff]
    %v49 = vld [vmem:[%s0 + $0x8] sm:$0xff]
    %v50 = vpack.c.bf16 %v48, %v48
    %v51 = vpack.c.bf16 %v49, %v49
    %v52 = vld [vmem:[#allocation2] sm:$0xff]
    %v53 = vld [vmem:[#allocation2 + $0x8] sm:$0xff]
    %v54 = vld [vmem:[#allocation2 + $0x10] sm:$0xff]
    %v55 = vld [vmem:[#allocation2 + $0x18] sm:$0xff]
    %v56 = vld [vmem:[#allocation2 + $0x20] sm:$0xff]
    %v57 = vld [vmem:[#allocation2 + $0x28] sm:$0xff]
    %v58 = vld [vmem:[#allocation2 + $0x30] sm:$0xff]
    %v59 = vld [vmem:[#allocation2 + $0x38] sm:$0xff]
    %v60 = vld [vmem:[#allocation2 + $0x40] sm:$0xff]
    %v61 = vld [vmem:[#allocation2 + $0x48] sm:$0xff]
    %v62 = vld [vmem:[#allocation2 + $0x50] sm:$0xff]
    %v63 = vld [vmem:[#allocation2 + $0x58] sm:$0xff]
    %v64 = vld [vmem:[#allocation2 + $0x60] sm:$0xff]
    %v65 = vld [vmem:[#allocation2 + $0x68] sm:$0xff]
    %v66 = vld [vmem:[#allocation2 + $0x70] sm:$0xff]
    %v67 = vld [vmem:[#allocation2 + $0x78] sm:$0xff]
    %v68 = vld [vmem:[#allocation2 + $0x80] sm:$0xff]
    %v69 = vld [vmem:[#allocation2 + $0x88] sm:$0xff]
    %v70 = vld [vmem:[#allocation2 + $0x90] sm:$0xff]
    %v71 = vld [vmem:[#allocation2 + $0x98] sm:$0xff]
    %v72 = vld [vmem:[#allocation2 + $0xa0] sm:$0xff]
    %v73 = vld [vmem:[#allocation2 + $0xa8] sm:$0xff]
    %v74 = vld [vmem:[#allocation2 + $0xb0] sm:$0xff]
    %v75 = vld [vmem:[#allocation2 + $0xb8] sm:$0xff]
    %v76 = vld [vmem:[#allocation2 + $0xc0] sm:$0xff]
    %v77 = vld [vmem:[#allocation2 + $0xc8] sm:$0xff]
    %v78 = vld [vmem:[#allocation2 + $0xd0] sm:$0xff]
    %v79 = vld [vmem:[#allocation2 + $0xd8] sm:$0xff]
    %v80 = vld [vmem:[#allocation2 + $0xe0] sm:$0xff]
    %v81 = vld [vmem:[#allocation2 + $0xe8] sm:$0xff]
    %v82 = vld [vmem:[#allocation2 + $0xf0] sm:$0xff]
    %v83 = vld [vmem:[#allocation2 + $0xf8] sm:$0xff]
    %v84 = vld [vmem:[#allocation2 + $0x100] sm:$0xff]
    %v85 = vld [vmem:[#allocation2 + $0x108] sm:$0xff]
    %v86 = vld [vmem:[#allocation2 + $0x110] sm:$0xff]
    %v87 = vld [vmem:[#allocation2 + $0x118] sm:$0xff]
    %v88 = vld [vmem:[#allocation2 + $0x120] sm:$0xff]
    %v89 = vld [vmem:[#allocation2 + $0x128] sm:$0xff]
    %v90 = vld [vmem:[#allocation2 + $0x130] sm:$0xff]
    %v91 = vld [vmem:[#allocation2 + $0x138] sm:$0xff]
    %v92 = vld [vmem:[#allocation2 + $0x140] sm:$0xff]
    %v93 = vld [vmem:[#allocation2 + $0x148] sm:$0xff]
    %v94 = vld [vmem:[#allocation2 + $0x150] sm:$0xff]
    %v95 = vld [vmem:[#allocation2 + $0x158] sm:$0xff]
    %v96 = vld [vmem:[#allocation2 + $0x160] sm:$0xff]
    %v97 = vld [vmem:[#allocation2 + $0x168] sm:$0xff]
    %v98 = vld [vmem:[#allocation2 + $0x170] sm:$0xff]
    %v99 = vld [vmem:[#allocation2 + $0x178] sm:$0xff]
    %v100 = vld [vmem:[#allocation2 + $0x180] sm:$0xff]
    %v101 = vld [vmem:[#allocation2 + $0x188] sm:$0xff]
    %v102 = vld [vmem:[#allocation2 + $0x190] sm:$0xff]
    %v103 = vld [vmem:[#allocation2 + $0x198] sm:$0xff]
    %v104 = vld [vmem:[#allocation2 + $0x1a0] sm:$0xff]
    %v105 = vld [vmem:[#allocation2 + $0x1a8] sm:$0xff]
    %v106 = vld [vmem:[#allocation2 + $0x1b0] sm:$0xff]
    %v107 = vld [vmem:[#allocation2 + $0x1b8] sm:$0xff]
    %v108 = vld [vmem:[#allocation2 + $0x1c0] sm:$0xff]
    %v109 = vld [vmem:[#allocation2 + $0x1c8] sm:$0xff]
    %v110 = vld [vmem:[#allocation2 + $0x1d0] sm:$0xff]
    %v111 = vld [vmem:[#allocation2 + $0x1d8] sm:$0xff]
    %v112 = vld [vmem:[#allocation2 + $0x1e0] sm:$0xff]
    %v113 = vld [vmem:[#allocation2 + $0x1e8] sm:$0xff]
    %v114 = vld [vmem:[#allocation2 + $0x1f0] sm:$0xff]
    %v115 = vld [vmem:[#allocation2 + $0x1f8] sm:$0xff]
    %v116 = vld [vmem:[#allocation2 + $0x200] sm:$0xff]
    %v117 = vld [vmem:[#allocation2 + $0x208] sm:$0xff]
    %v118 = vld [vmem:[#allocation2 + $0x210] sm:$0xff]
    %v119 = vld [vmem:[#allocation2 + $0x218] sm:$0xff]
    %v120 = vld [vmem:[#allocation2 + $0x220] sm:$0xff]
    %v121 = vld [vmem:[#allocation2 + $0x228] sm:$0xff]
    %v122 = vld [vmem:[#allocation2 + $0x230] sm:$0xff]
    %v123 = vld [vmem:[#allocation2 + $0x238] sm:$0xff]
    %v124 = vld [vmem:[#allocation2 + $0x240] sm:$0xff]
    %v125 = vld [vmem:[#allocation2 + $0x248] sm:$0xff]
    %v126 = vld [vmem:[#allocation2 + $0x250] sm:$0xff]
    %v127 = vld [vmem:[#allocation2 + $0x258] sm:$0xff]
    %v128 = vld [vmem:[#allocation2 + $0x260] sm:$0xff]
    %v129 = vld [vmem:[#allocation2 + $0x268] sm:$0xff]
    %v130 = vld [vmem:[#allocation2 + $0x270] sm:$0xff]
    %v131 = vld [vmem:[#allocation2 + $0x278] sm:$0xff]
    %v132 = vld [vmem:[#allocation2 + $0x280] sm:$0xff]
    %v133 = vld [vmem:[#allocation2 + $0x288] sm:$0xff]
    %v134 = vld [vmem:[#allocation2 + $0x290] sm:$0xff]
    %v135 = vld [vmem:[#allocation2 + $0x298] sm:$0xff]
    %v136 = vld [vmem:[#allocation2 + $0x2a0] sm:$0xff]
    %v137 = vld [vmem:[#allocation2 + $0x2a8] sm:$0xff]
    %v138 = vld [vmem:[#allocation2 + $0x2b0] sm:$0xff]
    %v139 = vld [vmem:[#allocation2 + $0x2b8] sm:$0xff]
    %v140 = vld [vmem:[#allocation2 + $0x2c0] sm:$0xff]
    %v141 = vld [vmem:[#allocation2 + $0x2c8] sm:$0xff]
    %v142 = vld [vmem:[#allocation2 + $0x2d0] sm:$0xff]
    %v143 = vld [vmem:[#allocation2 + $0x2d8] sm:$0xff]
    %v144 = vld [vmem:[#allocation2 + $0x2e0] sm:$0xff]
    %v145 = vld [vmem:[#allocation2 + $0x2e8] sm:$0xff]
    %v146 = vld [vmem:[#allocation2 + $0x2f0] sm:$0xff]
    %v147 = vld [vmem:[#allocation2 + $0x2f8] sm:$0xff]
    %v244 = vunpack.c.l.b16 %v52
    %v245 = vunpack.c.h.b16 %v52
    %v246 = vunpack.c.l.b16 %v53
    %v247 = vunpack.c.h.b16 %v53
    %v248 = vunpack.c.l.b16 %v54
    %v249 = vunpack.c.h.b16 %v54
    %v250 = vunpack.c.l.b16 %v55
    %v251 = vunpack.c.h.b16 %v55
    %v252 = vunpack.c.l.b16 %v56
    %v253 = vunpack.c.h.b16 %v56
    %v254 = vunpack.c.l.b16 %v57
    %v255 = vunpack.c.h.b16 %v57
    %v256 = vunpack.c.l.b16 %v58
    %v257 = vunpack.c.h.b16 %v58
    %v258 = vunpack.c.l.b16 %v59
    %v259 = vunpack.c.h.b16 %v59
    %v260 = vunpack.c.l.b16 %v60
    %v261 = vunpack.c.h.b16 %v60
    %v262 = vunpack.c.l.b16 %v61
    %v263 = vunpack.c.h.b16 %v61
    %v264 = vunpack.c.l.b16 %v62
    %v265 = vunpack.c.h.b16 %v62
    %v266 = vunpack.c.l.b16 %v63
    %v267 = vunpack.c.h.b16 %v63
    %v268 = vunpack.c.l.b16 %v64
    %v269 = vunpack.c.h.b16 %v64
    %v270 = vunpack.c.l.b16 %v65
    %v271 = vunpack.c.h.b16 %v65
    %v272 = vunpack.c.l.b16 %v66
    %v273 = vunpack.c.h.b16 %v66
    %v274 = vunpack.c.l.b16 %v67
    %v275 = vunpack.c.h.b16 %v67
    %v276 = vunpack.c.l.b16 %v68
    %v277 = vunpack.c.h.b16 %v68
    %v278 = vunpack.c.l.b16 %v69
    %v279 = vunpack.c.h.b16 %v69
    %v280 = vunpack.c.l.b16 %v70
    %v281 = vunpack.c.h.b16 %v70
    %v282 = vunpack.c.l.b16 %v71
    %v283 = vunpack.c.h.b16 %v71
    %v284 = vunpack.c.l.b16 %v72
    %v285 = vunpack.c.h.b16 %v72
    %v286 = vunpack.c.l.b16 %v73
    %v287 = vunpack.c.h.b16 %v73
    %v288 = vunpack.c.l.b16 %v74
    %v289 = vunpack.c.h.b16 %v74
    %v290 = vunpack.c.l.b16 %v75
    %v291 = vunpack.c.h.b16 %v75
    %v292 = vunpack.c.l.b16 %v76
    %v293 = vunpack.c.h.b16 %v76
    %v294 = vunpack.c.l.b16 %v77
    %v295 = vunpack.c.h.b16 %v77
    %v296 = vunpack.c.l.b16 %v78
    %v297 = vunpack.c.h.b16 %v78
    %v298 = vunpack.c.l.b16 %v79
    %v299 = vunpack.c.h.b16 %v79
    %v300 = vunpack.c.l.b16 %v80
    %v301 = vunpack.c.h.b16 %v80
    %v302 = vunpack.c.l.b16 %v81
    %v303 = vunpack.c.h.b16 %v81
    %v304 = vunpack.c.l.b16 %v82
    %v305 = vunpack.c.h.b16 %v82
    %v306 = vunpack.c.l.b16 %v83
    %v307 = vunpack.c.h.b16 %v83
    %v308 = vunpack.c.l.b16 %v84
    %v309 = vunpack.c.h.b16 %v84
    %v310 = vunpack.c.l.b16 %v85
    %v311 = vunpack.c.h.b16 %v85
    %v312 = vunpack.c.l.b16 %v86
    %v313 = vunpack.c.h.b16 %v86
    %v314 = vunpack.c.l.b16 %v87
    %v315 = vunpack.c.h.b16 %v87
    %v316 = vunpack.c.l.b16 %v88
    %v317 = vunpack.c.h.b16 %v88
    %v318 = vunpack.c.l.b16 %v89
    %v319 = vunpack.c.h.b16 %v89
    %v320 = vunpack.c.l.b16 %v90
    %v321 = vunpack.c.h.b16 %v90
    %v322 = vunpack.c.l.b16 %v91
    %v323 = vunpack.c.h.b16 %v91
    %v324 = vunpack.c.l.b16 %v92
    %v325 = vunpack.c.h.b16 %v92
    %v326 = vunpack.c.l.b16 %v93
    %v327 = vunpack.c.h.b16 %v93
    %v328 = vunpack.c.l.b16 %v94
    %v329 = vunpack.c.h.b16 %v94
    %v330 = vunpack.c.l.b16 %v95
    %v331 = vunpack.c.h.b16 %v95
    %v332 = vunpack.c.l.b16 %v96
    %v333 = vunpack.c.h.b16 %v96
    %v334 = vunpack.c.l.b16 %v97
    %v335 = vunpack.c.h.b16 %v97
    %v336 = vunpack.c.l.b16 %v98
    %v337 = vunpack.c.h.b16 %v98
    %v338 = vunpack.c.l.b16 %v99
    %v339 = vunpack.c.h.b16 %v99
    %v340 = vunpack.c.l.b16 %v100
    %v341 = vunpack.c.h.b16 %v100
    %v342 = vunpack.c.l.b16 %v101
    %v343 = vunpack.c.h.b16 %v101
    %v344 = vunpack.c.l.b16 %v102
    %v345 = vunpack.c.h.b16 %v102
    %v346 = vunpack.c.l.b16 %v103
    %v347 = vunpack.c.h.b16 %v103
    %v348 = vunpack.c.l.b16 %v104
    %v349 = vunpack.c.h.b16 %v104
    %v350 = vunpack.c.l.b16 %v105
    %v351 = vunpack.c.h.b16 %v105
    %v352 = vunpack.c.l.b16 %v106
    %v353 = vunpack.c.h.b16 %v106
    %v354 = vunpack.c.l.b16 %v107
    %v355 = vunpack.c.h.b16 %v107
    %v356 = vunpack.c.l.b16 %v108
    %v357 = vunpack.c.h.b16 %v108
    %v358 = vunpack.c.l.b16 %v109
    %v359 = vunpack.c.h.b16 %v109
    %v360 = vunpack.c.l.b16 %v110
    %v361 = vunpack.c.h.b16 %v110
    %v362 = vunpack.c.l.b16 %v111
    %v363 = vunpack.c.h.b16 %v111
    %v364 = vunpack.c.l.b16 %v112
    %v365 = vunpack.c.h.b16 %v112
    %v366 = vunpack.c.l.b16 %v113
    %v367 = vunpack.c.h.b16 %v113
    %v368 = vunpack.c.l.b16 %v114
    %v369 = vunpack.c.h.b16 %v114
    %v370 = vunpack.c.l.b16 %v115
    %v371 = vunpack.c.h.b16 %v115
    %v372 = vunpack.c.l.b16 %v116
    %v373 = vunpack.c.h.b16 %v116
    %v374 = vunpack.c.l.b16 %v117
    %v375 = vunpack.c.h.b16 %v117
    %v376 = vunpack.c.l.b16 %v118
    %v377 = vunpack.c.h.b16 %v118
    %v378 = vunpack.c.l.b16 %v119
    %v379 = vunpack.c.h.b16 %v119
    %v380 = vunpack.c.l.b16 %v120
    %v381 = vunpack.c.h.b16 %v120
    %v382 = vunpack.c.l.b16 %v121
    %v383 = vunpack.c.h.b16 %v121
    %v384 = vunpack.c.l.b16 %v122
    %v385 = vunpack.c.h.b16 %v122
    %v386 = vunpack.c.l.b16 %v123
    %v387 = vunpack.c.h.b16 %v123
    %v388 = vunpack.c.l.b16 %v124
    %v389 = vunpack.c.h.b16 %v124
    %v390 = vunpack.c.l.b16 %v125
    %v391 = vunpack.c.h.b16 %v125
    %v392 = vunpack.c.l.b16 %v126
    %v393 = vunpack.c.h.b16 %v126
    %v394 = vunpack.c.l.b16 %v127
    %v395 = vunpack.c.h.b16 %v127
    %v396 = vunpack.c.l.b16 %v128
    %v397 = vunpack.c.h.b16 %v128
    %v398 = vunpack.c.l.b16 %v129
    %v399 = vunpack.c.h.b16 %v129
    %v400 = vunpack.c.l.b16 %v130
    %v401 = vunpack.c.h.b16 %v130
    %v402 = vunpack.c.l.b16 %v131
    %v403 = vunpack.c.h.b16 %v131
    %v404 = vunpack.c.l.b16 %v132
    %v405 = vunpack.c.h.b16 %v132
    %v406 = vunpack.c.l.b16 %v133
    %v407 = vunpack.c.h.b16 %v133
    %v408 = vunpack.c.l.b16 %v134
    %v409 = vunpack.c.h.b16 %v134
    %v410 = vunpack.c.l.b16 %v135
    %v411 = vunpack.c.h.b16 %v135
    %v412 = vunpack.c.l.b16 %v136
    %v413 = vunpack.c.h.b16 %v136
    %v414 = vunpack.c.l.b16 %v137
    %v415 = vunpack.c.h.b16 %v137
    %v416 = vunpack.c.l.b16 %v138
    %v417 = vunpack.c.h.b16 %v138
    %v418 = vunpack.c.l.b16 %v139
    %v419 = vunpack.c.h.b16 %v139
    %v420 = vunpack.c.l.b16 %v140
    %v421 = vunpack.c.h.b16 %v140
    %v422 = vunpack.c.l.b16 %v141
    %v423 = vunpack.c.h.b16 %v141
    %v424 = vunpack.c.l.b16 %v142
    %v425 = vunpack.c.h.b16 %v142
    %v426 = vunpack.c.l.b16 %v143
    %v427 = vunpack.c.h.b16 %v143
    %v428 = vunpack.c.l.b16 %v144
    %v429 = vunpack.c.h.b16 %v144
    %v430 = vunpack.c.l.b16 %v145
    %v431 = vunpack.c.h.b16 %v145
    %v432 = vunpack.c.l.b16 %v146
    %v433 = vunpack.c.h.b16 %v146
    %v434 = vunpack.c.l.b16 %v147
    %v435 = vunpack.c.h.b16 %v147
    %v436 = vpack.c.b16 %v250, %v244
    %v437 = vpack.c.b16 %v251, %v245
    %v438 = vpack.c.b16 %v252, %v246
    %v439 = vpack.c.b16 %v253, %v247
    %v440 = vpack.c.b16 %v254, %v248
    %v441 = vpack.c.b16 %v255, %v249
    %v442 = vpack.c.b16 %v262, %v256
    %v443 = vpack.c.b16 %v263, %v257
    %v444 = vpack.c.b16 %v264, %v258
    %v445 = vpack.c.b16 %v265, %v259
    %v446 = vpack.c.b16 %v266, %v260
    %v447 = vpack.c.b16 %v267, %v261
    %v448 = vpack.c.b16 %v274, %v268
    %v449 = vpack.c.b16 %v275, %v269
    %v450 = vpack.c.b16 %v276, %v270
    %v451 = vpack.c.b16 %v277, %v271
    %v452 = vpack.c.b16 %v278, %v272
    %v453 = vpack.c.b16 %v279, %v273
    %v454 = vpack.c.b16 %v286, %v280
    %v455 = vpack.c.b16 %v287, %v281
    %v456 = vpack.c.b16 %v288, %v282
    %v457 = vpack.c.b16 %v289, %v283
    %v458 = vpack.c.b16 %v290, %v284
    %v459 = vpack.c.b16 %v291, %v285
    %v460 = vpack.c.b16 %v298, %v292
    %v461 = vpack.c.b16 %v299, %v293
    %v462 = vpack.c.b16 %v300, %v294
    %v463 = vpack.c.b16 %v301, %v295
    %v464 = vpack.c.b16 %v302, %v296
    %v465 = vpack.c.b16 %v303, %v297
    %v466 = vpack.c.b16 %v310, %v304
    %v467 = vpack.c.b16 %v311, %v305
    %v468 = vpack.c.b16 %v312, %v306
    %v469 = vpack.c.b16 %v313, %v307
    %v470 = vpack.c.b16 %v314, %v308
    %v471 = vpack.c.b16 %v315, %v309
    %v472 = vpack.c.b16 %v322, %v316
    %v473 = vpack.c.b16 %v323, %v317
    %v474 = vpack.c.b16 %v324, %v318
    %v475 = vpack.c.b16 %v325, %v319
    %v476 = vpack.c.b16 %v326, %v320
    %v477 = vpack.c.b16 %v327, %v321
    %v478 = vpack.c.b16 %v334, %v328
    %v479 = vpack.c.b16 %v335, %v329
    %v480 = vpack.c.b16 %v336, %v330
    %v481 = vpack.c.b16 %v337, %v331
    %v482 = vpack.c.b16 %v338, %v332
    %v483 = vpack.c.b16 %v339, %v333
    %v484 = vpack.c.b16 %v346, %v340
    %v485 = vpack.c.b16 %v347, %v341
    %v486 = vpack.c.b16 %v348, %v342
    %v487 = vpack.c.b16 %v349, %v343
    %v488 = vpack.c.b16 %v350, %v344
    %v489 = vpack.c.b16 %v351, %v345
    %v490 = vpack.c.b16 %v358, %v352
    %v491 = vpack.c.b16 %v359, %v353
    %v492 = vpack.c.b16 %v360, %v354
    %v493 = vpack.c.b16 %v361, %v355
    %v494 = vpack.c.b16 %v362, %v356
    %v495 = vpack.c.b16 %v363, %v357
    %v496 = vpack.c.b16 %v370, %v364
    %v497 = vpack.c.b16 %v371, %v365
    %v498 = vpack.c.b16 %v372, %v366
    %v499 = vpack.c.b16 %v373, %v367
    %v500 = vpack.c.b16 %v374, %v368
    %v501 = vpack.c.b16 %v375, %v369
    %v502 = vpack.c.b16 %v382, %v376
    %v503 = vpack.c.b16 %v383, %v377
    %v504 = vpack.c.b16 %v384, %v378
    %v505 = vpack.c.b16 %v385, %v379
    %v506 = vpack.c.b16 %v386, %v380
    %v507 = vpack.c.b16 %v387, %v381
    %v508 = vpack.c.b16 %v394, %v388
    %v509 = vpack.c.b16 %v395, %v389
    %v510 = vpack.c.b16 %v396, %v390
    %v511 = vpack.c.b16 %v397, %v391
    %v512 = vpack.c.b16 %v398, %v392
    %v513 = vpack.c.b16 %v399, %v393
    %v514 = vpack.c.b16 %v406, %v400
    %v515 = vpack.c.b16 %v407, %v401
    %v516 = vpack.c.b16 %v408, %v402
    %v517 = vpack.c.b16 %v409, %v403
    %v518 = vpack.c.b16 %v410, %v404
    %v519 = vpack.c.b16 %v411, %v405
    %v520 = vpack.c.b16 %v418, %v412
    %v521 = vpack.c.b16 %v419, %v413
    %v522 = vpack.c.b16 %v420, %v414
    %v523 = vpack.c.b16 %v421, %v415
    %v524 = vpack.c.b16 %v422, %v416
    %v525 = vpack.c.b16 %v423, %v417
    %v526 = vpack.c.b16 %v430, %v424
    %v527 = vpack.c.b16 %v431, %v425
    %v528 = vpack.c.b16 %v432, %v426
    %v529 = vpack.c.b16 %v433, %v427
    %v530 = vpack.c.b16 %v434, %v428
    %v531 = vpack.c.b16 %v435, %v429
    %628 = vmatprep.subr.bf16.mxu0 %v437
    %629 = vmatpush1.bf16.msra.mxu0 %v436
    %630 = vmatprep.subr.bf16.mxu0 %v443
    %631 = vmatpush1.bf16.msra.mxu0 %v442
    %632 = vmatprep.subr.bf16.mxu0 %v449
    %633 = vmatpush1.bf16.msra.mxu0 %v448
    %634 = vmatprep.subr.bf16.mxu0 %v455
    %635 = vmatpush1.bf16.msra.mxu0 %v454
    %636 = vmatprep.subr.bf16.mxu0 %v461
    %637 = vmatpush1.bf16.msra.mxu0 %v460
    %638 = vmatprep.subr.bf16.mxu0 %v467
    %639 = vmatpush1.bf16.msra.mxu0 %v466
    %640 = vmatprep.subr.bf16.mxu0 %v473
    %641 = vmatpush1.bf16.msra.mxu0 %v472
    %642 = vmatprep.subr.bf16.mxu0 %v479
    %643 = vmatpush1.bf16.msra.mxu0 %v478
    %644 = vmatprep.subr.bf16.mxu0 %v485
    %645 = vmatpush1.bf16.msra.mxu0 %v484
    %646 = vmatprep.subr.bf16.mxu0 %v491
    %647 = vmatpush1.bf16.msra.mxu0 %v490
    %648 = vmatprep.subr.bf16.mxu0 %v497
    %649 = vmatpush1.bf16.msra.mxu0 %v496
    %650 = vmatprep.subr.bf16.mxu0 %v503
    %651 = vmatpush1.bf16.msra.mxu0 %v502
    %652 = vmatprep.subr.bf16.mxu0 %v509
    %653 = vmatpush1.bf16.msra.mxu0 %v508
    %654 = vmatprep.subr.bf16.mxu0 %v515
    %655 = vmatpush1.bf16.msra.mxu0 %v514
    %656 = vmatprep.subr.bf16.mxu0 %v521
    %657 = vmatpush1.bf16.msra.mxu0 %v520
    %658 = vmatprep.subr.bf16.mxu0 %v527
    %659 = vmatpush1.bf16.msra.mxu0 %v526
    %660 = vmatprep.mubr.bf16.mxu0 %v51
    %661 = vmatmul.mubr.bf16.gmra.mrb[0].mxu0 %v50
    %v662 = vpop.f32.mrb[0].mxu0
    %v663 = vadd.f32 0.0, %v662
    %v664 = vpop.f32.mrb[0].mxu0
    %v665 = vadd.f32 0.0, %v664
    %v666 = vpop.f32.mrb[0].mxu0
    %v667 = vpop.f32.mrb[0].mxu0
    %668 = vdwg.mxu0
    %669 = vmatprep.subr.bf16.mxu0 %v439
    %670 = vmatpush1.bf16.msra.mxu0 %v438
    %671 = vmatprep.subr.bf16.mxu0 %v445
    %672 = vmatpush1.bf16.msra.mxu0 %v444
    %673 = vmatprep.subr.bf16.mxu0 %v451
    %674 = vmatpush1.bf16.msra.mxu0 %v450
    %675 = vmatprep.subr.bf16.mxu0 %v457
    %676 = vmatpush1.bf16.msra.mxu0 %v456
    %677 = vmatprep.subr.bf16.mxu0 %v463
    %678 = vmatpush1.bf16.msra.mxu0 %v462
    %679 = vmatprep.subr.bf16.mxu0 %v469
    %680 = vmatpush1.bf16.msra.mxu0 %v468
    %681 = vmatprep.subr.bf16.mxu0 %v475
    %682 = vmatpush1.bf16.msra.mxu0 %v474
    %683 = vmatprep.subr.bf16.mxu0 %v481
    %684 = vmatpush1.bf16.msra.mxu0 %v480
    %685 = vmatprep.subr.bf16.mxu0 %v487
    %686 = vmatpush1.bf16.msra.mxu0 %v486
    %687 = vmatprep.subr.bf16.mxu0 %v493
    %688 = vmatpush1.bf16.msra.mxu0 %v492
    %689 = vmatprep.subr.bf16.mxu0 %v499
    %690 = vmatpush1.bf16.msra.mxu0 %v498
    %691 = vmatprep.subr.bf16.mxu0 %v505
    %692 = vmatpush1.bf16.msra.mxu0 %v504
    %693 = vmatprep.subr.bf16.mxu0 %v511
    %694 = vmatpush1.bf16.msra.mxu0 %v510
    %695 = vmatprep.subr.bf16.mxu0 %v517
    %696 = vmatpush1.bf16.msra.mxu0 %v516
    %697 = vmatprep.subr.bf16.mxu0 %v523
    %698 = vmatpush1.bf16.msra.mxu0 %v522
    %699 = vmatprep.subr.bf16.mxu0 %v529
    %700 = vmatpush1.bf16.msra.mxu0 %v528
    %701 = vmatprep.mubr.bf16.mxu0 %v51
    %702 = vmatmul.mubr.bf16.gmra.mrb[0].mxu0 %v50
    %v703 = vpop.f32.mrb[0].mxu0
    %v704 = vadd.f32 0.0, %v703
    %v705 = vpop.f32.mrb[0].mxu0
    %v706 = vadd.f32 0.0, %v705
    %v707 = vpop.f32.mrb[0].mxu0
    %v708 = vpop.f32.mrb[0].mxu0
    %709 = vdwg.mxu0
    %710 = vmatprep.subr.bf16.mxu0 %v441
    %711 = vmatpush1.bf16.msra.mxu0 %v440
    %712 = vmatprep.subr.bf16.mxu0 %v447
    %713 = vmatpush1.bf16.msra.mxu0 %v446
    %714 = vmatprep.subr.bf16.mxu0 %v453
    %715 = vmatpush1.bf16.msra.mxu0 %v452
    %716 = vmatprep.subr.bf16.mxu0 %v459
    %717 = vmatpush1.bf16.msra.mxu0 %v458
    %718 = vmatprep.subr.bf16.mxu0 %v465
    %719 = vmatpush1.bf16.msra.mxu0 %v464
    %720 = vmatprep.subr.bf16.mxu0 %v471
    %721 = vmatpush1.bf16.msra.mxu0 %v470
    %722 = vmatprep.subr.bf16.mxu0 %v477
    %723 = vmatpush1.bf16.msra.mxu0 %v476
    %724 = vmatprep.subr.bf16.mxu0 %v483
    %725 = vmatpush1.bf16.msra.mxu0 %v482
    %726 = vmatprep.subr.bf16.mxu0 %v489
    %727 = vmatpush1.bf16.msra.mxu0 %v488
    %728 = vmatprep.subr.bf16.mxu0 %v495
    %729 = vmatpush1.bf16.msra.mxu0 %v494
    %730 = vmatprep.subr.bf16.mxu0 %v501
    %731 = vmatpush1.bf16.msra.mxu0 %v500
    %732 = vmatprep.subr.bf16.mxu0 %v507
    %733 = vmatpush1.bf16.msra.mxu0 %v506
    %734 = vmatprep.subr.bf16.mxu0 %v513
    %735 = vmatpush1.bf16.msra.mxu0 %v512
    %736 = vmatprep.subr.bf16.mxu0 %v519
    %737 = vmatpush1.bf16.msra.mxu0 %v518
    %738 = vmatprep.subr.bf16.mxu0 %v525
    %739 = vmatpush1.bf16.msra.mxu0 %v524
    %740 = vmatprep.subr.bf16.mxu0 %v531
    %741 = vmatpush1.bf16.msra.mxu0 %v530
    %742 = vmatprep.mubr.bf16.mxu0 %v51
    %743 = vmatmul.mubr.bf16.gmra.mrb[0].mxu0 %v50
    %v744 = vpop.f32.mrb[0].mxu0
    %v745 = vadd.f32 0.0, %v744
    %v746 = vpop.f32.mrb[0].mxu0
    %v747 = vadd.f32 0.0, %v746
    %v748 = vpop.f32.mrb[0].mxu0
    %v749 = vpop.f32.mrb[0].mxu0
    %750 = vdwg.mxu0
    %v751 = vld [vmem:[#allocation4] sm:$0xff]
    %v752 = vld [vmem:[#allocation4 + $0x8] sm:$0xff]
    %v753 = vld [vmem:[#allocation4 + $0x10] sm:$0xff]
    %v754 = vld [vmem:[#allocation4 + $0x18] sm:$0xff]
    %v755 = vld [vmem:[#allocation4 + $0x20] sm:$0xff]
    %v756 = vld [vmem:[#allocation4 + $0x28] sm:$0xff]
    %v757 = vld [vmem:[#allocation4 + $0x30] sm:$0xff]
    %v758 = vld [vmem:[#allocation4 + $0x38] sm:$0xff]
    %v759 = vld [vmem:[#allocation4 + $0x40] sm:$0xff]
    %v760 = vld [vmem:[#allocation4 + $0x48] sm:$0xff]
    %v761 = vld [vmem:[#allocation4 + $0x50] sm:$0xff]
    %v762 = vld [vmem:[#allocation4 + $0x58] sm:$0xff]
    %v763 = vld [vmem:[#allocation4 + $0x60] sm:$0xff]
    %v764 = vld [vmem:[#allocation4 + $0x68] sm:$0xff]
    %v765 = vld [vmem:[#allocation4 + $0x70] sm:$0xff]
    %v766 = vld [vmem:[#allocation4 + $0x78] sm:$0xff]
    %v767 = vld [vmem:[#allocation4 + $0x80] sm:$0xff]
    %v768 = vld [vmem:[#allocation4 + $0x88] sm:$0xff]
    %v769 = vld [vmem:[#allocation4 + $0x90] sm:$0xff]
    %v770 = vld [vmem:[#allocation4 + $0x98] sm:$0xff]
    %v771 = vld [vmem:[#allocation4 + $0xa0] sm:$0xff]
    %v772 = vld [vmem:[#allocation4 + $0xa8] sm:$0xff]
    %v773 = vld [vmem:[#allocation4 + $0xb0] sm:$0xff]
    %v774 = vld [vmem:[#allocation4 + $0xb8] sm:$0xff]
    %v775 = vld [vmem:[#allocation4 + $0xc0] sm:$0xff]
    %v776 = vld [vmem:[#allocation4 + $0xc8] sm:$0xff]
    %v777 = vld [vmem:[#allocation4 + $0xd0] sm:$0xff]
    %v778 = vld [vmem:[#allocation4 + $0xd8] sm:$0xff]
    %v779 = vld [vmem:[#allocation4 + $0xe0] sm:$0xff]
    %v780 = vld [vmem:[#allocation4 + $0xe8] sm:$0xff]
    %v781 = vld [vmem:[#allocation4 + $0xf0] sm:$0xff]
    %v782 = vld [vmem:[#allocation4 + $0xf8] sm:$0xff]
    %v783 = vld [vmem:[#allocation4 + $0x100] sm:$0xff]
    %v784 = vld [vmem:[#allocation4 + $0x108] sm:$0xff]
    %v785 = vld [vmem:[#allocation4 + $0x110] sm:$0xff]
    %v786 = vld [vmem:[#allocation4 + $0x118] sm:$0xff]
    %v787 = vld [vmem:[#allocation4 + $0x120] sm:$0xff]
    %v788 = vld [vmem:[#allocation4 + $0x128] sm:$0xff]
    %v789 = vld [vmem:[#allocation4 + $0x130] sm:$0xff]
    %v790 = vld [vmem:[#allocation4 + $0x138] sm:$0xff]
    %v791 = vld [vmem:[#allocation4 + $0x140] sm:$0xff]
    %v792 = vld [vmem:[#allocation4 + $0x148] sm:$0xff]
    %v793 = vld [vmem:[#allocation4 + $0x150] sm:$0xff]
    %v794 = vld [vmem:[#allocation4 + $0x158] sm:$0xff]
    %v795 = vld [vmem:[#allocation4 + $0x160] sm:$0xff]
    %v796 = vld [vmem:[#allocation4 + $0x168] sm:$0xff]
    %v797 = vld [vmem:[#allocation4 + $0x170] sm:$0xff]
    %v798 = vld [vmem:[#allocation4 + $0x178] sm:$0xff]
    %v799 = vld [vmem:[#allocation4 + $0x180] sm:$0xff]
    %v800 = vld [vmem:[#allocation4 + $0x188] sm:$0xff]
    %v801 = vld [vmem:[#allocation4 + $0x190] sm:$0xff]
    %v802 = vld [vmem:[#allocation4 + $0x198] sm:$0xff]
    %v803 = vld [vmem:[#allocation4 + $0x1a0] sm:$0xff]
    %v804 = vld [vmem:[#allocation4 + $0x1a8] sm:$0xff]
    %v805 = vld [vmem:[#allocation4 + $0x1b0] sm:$0xff]
    %v806 = vld [vmem:[#allocation4 + $0x1b8] sm:$0xff]
    %v807 = vld [vmem:[#allocation4 + $0x1c0] sm:$0xff]
    %v808 = vld [vmem:[#allocation4 + $0x1c8] sm:$0xff]
    %v809 = vld [vmem:[#allocation4 + $0x1d0] sm:$0xff]
    %v810 = vld [vmem:[#allocation4 + $0x1d8] sm:$0xff]
    %v811 = vld [vmem:[#allocation4 + $0x1e0] sm:$0xff]
    %v812 = vld [vmem:[#allocation4 + $0x1e8] sm:$0xff]
    %v813 = vld [vmem:[#allocation4 + $0x1f0] sm:$0xff]
    %v814 = vld [vmem:[#allocation4 + $0x1f8] sm:$0xff]
    %v815 = vld [vmem:[#allocation4 + $0x200] sm:$0xff]
    %v816 = vld [vmem:[#allocation4 + $0x208] sm:$0xff]
    %v817 = vld [vmem:[#allocation4 + $0x210] sm:$0xff]
    %v818 = vld [vmem:[#allocation4 + $0x218] sm:$0xff]
    %v819 = vld [vmem:[#allocation4 + $0x220] sm:$0xff]
    %v820 = vld [vmem:[#allocation4 + $0x228] sm:$0xff]
    %v821 = vld [vmem:[#allocation4 + $0x230] sm:$0xff]
    %v822 = vld [vmem:[#allocation4 + $0x238] sm:$0xff]
    %v823 = vld [vmem:[#allocation4 + $0x240] sm:$0xff]
    %v824 = vld [vmem:[#allocation4 + $0x248] sm:$0xff]
    %v825 = vld [vmem:[#allocation4 + $0x250] sm:$0xff]
    %v826 = vld [vmem:[#allocation4 + $0x258] sm:$0xff]
    %v827 = vld [vmem:[#allocation4 + $0x260] sm:$0xff]
    %v828 = vld [vmem:[#allocation4 + $0x268] sm:$0xff]
    %v829 = vld [vmem:[#allocation4 + $0x270] sm:$0xff]
    %v830 = vld [vmem:[#allocation4 + $0x278] sm:$0xff]
    %v831 = vld [vmem:[#allocation4 + $0x280] sm:$0xff]
    %v832 = vld [vmem:[#allocation4 + $0x288] sm:$0xff]
    %v833 = vld [vmem:[#allocation4 + $0x290] sm:$0xff]
    %v834 = vld [vmem:[#allocation4 + $0x298] sm:$0xff]
    %v835 = vld [vmem:[#allocation4 + $0x2a0] sm:$0xff]
    %v836 = vld [vmem:[#allocation4 + $0x2a8] sm:$0xff]
    %v837 = vld [vmem:[#allocation4 + $0x2b0] sm:$0xff]
    %v838 = vld [vmem:[#allocation4 + $0x2b8] sm:$0xff]
    %v839 = vld [vmem:[#allocation4 + $0x2c0] sm:$0xff]
    %v840 = vld [vmem:[#allocation4 + $0x2c8] sm:$0xff]
    %v841 = vld [vmem:[#allocation4 + $0x2d0] sm:$0xff]
    %v842 = vld [vmem:[#allocation4 + $0x2d8] sm:$0xff]
    %v843 = vld [vmem:[#allocation4 + $0x2e0] sm:$0xff]
    %v844 = vld [vmem:[#allocation4 + $0x2e8] sm:$0xff]
    %v845 = vld [vmem:[#allocation4 + $0x2f0] sm:$0xff]
    %v846 = vld [vmem:[#allocation4 + $0x2f8] sm:$0xff]
    %v847 = vld [vmem:[%s4] sm:$0xff]
    %v848 = vld [vmem:[%s1] sm:$0x3]
    %v850 = vlaneseq
    %v851 = vshrl.u32 %v850, 7
    %v852 = vsub.s32 0, %v851
    %v853 = vrot.slane %v848, %v852
    %v854 = vlaneseq
    %v855 = vshrl.u32 %v854, 7
    %v856 = vsub.s32 1, %v855
    %v857 = vrot.slane %v848, %v856
    %v860 = vpack.c.bf16 %v853, %v853
    %v861 = vpack.c.bf16 %v857, %v857
    %v958 = vunpack.c.l.b16 %v751
    %v959 = vunpack.c.h.b16 %v751
    %v960 = vunpack.c.l.b16 %v752
    %v961 = vunpack.c.h.b16 %v752
    %v962 = vunpack.c.l.b16 %v753
    %v963 = vunpack.c.h.b16 %v753
    %v964 = vunpack.c.l.b16 %v754
    %v965 = vunpack.c.h.b16 %v754
    %v966 = vunpack.c.l.b16 %v755
    %v967 = vunpack.c.h.b16 %v755
    %v968 = vunpack.c.l.b16 %v756
    %v969 = vunpack.c.h.b16 %v756
    %v970 = vunpack.c.l.b16 %v757
    %v971 = vunpack.c.h.b16 %v757
    %v972 = vunpack.c.l.b16 %v758
    %v973 = vunpack.c.h.b16 %v758
    %v974 = vunpack.c.l.b16 %v759
    %v975 = vunpack.c.h.b16 %v759
    %v976 = vunpack.c.l.b16 %v760
    %v977 = vunpack.c.h.b16 %v760
    %v978 = vunpack.c.l.b16 %v761
    %v979 = vunpack.c.h.b16 %v761
    %v980 = vunpack.c.l.b16 %v762
    %v981 = vunpack.c.h.b16 %v762
    %v982 = vunpack.c.l.b16 %v763
    %v983 = vunpack.c.h.b16 %v763
    %v984 = vunpack.c.l.b16 %v764
    %v985 = vunpack.c.h.b16 %v764
    %v986 = vunpack.c.l.b16 %v765
    %v987 = vunpack.c.h.b16 %v765
    %v988 = vunpack.c.l.b16 %v766
    %v989 = vunpack.c.h.b16 %v766
    %v990 = vunpack.c.l.b16 %v767
    %v991 = vunpack.c.h.b16 %v767
    %v992 = vunpack.c.l.b16 %v768
    %v993 = vunpack.c.h.b16 %v768
    %v994 = vunpack.c.l.b16 %v769
    %v995 = vunpack.c.h.b16 %v769
    %v996 = vunpack.c.l.b16 %v770
    %v997 = vunpack.c.h.b16 %v770
    %v998 = vunpack.c.l.b16 %v771
    %v999 = vunpack.c.h.b16 %v771
    %v1000 = vunpack.c.l.b16 %v772
    %v1001 = vunpack.c.h.b16 %v772
    %v1002 = vunpack.c.l.b16 %v773
    %v1003 = vunpack.c.h.b16 %v773
    %v1004 = vunpack.c.l.b16 %v774
    %v1005 = vunpack.c.h.b16 %v774
    %v1006 = vunpack.c.l.b16 %v775
    %v1007 = vunpack.c.h.b16 %v775
    %v1008 = vunpack.c.l.b16 %v776
    %v1009 = vunpack.c.h.b16 %v776
    %v1010 = vunpack.c.l.b16 %v777
    %v1011 = vunpack.c.h.b16 %v777
    %v1012 = vunpack.c.l.b16 %v778
    %v1013 = vunpack.c.h.b16 %v778
    %v1014 = vunpack.c.l.b16 %v779
    %v1015 = vunpack.c.h.b16 %v779
    %v1016 = vunpack.c.l.b16 %v780
    %v1017 = vunpack.c.h.b16 %v780
    %v1018 = vunpack.c.l.b16 %v781
    %v1019 = vunpack.c.h.b16 %v781
    %v1020 = vunpack.c.l.b16 %v782
    %v1021 = vunpack.c.h.b16 %v782
    %v1022 = vunpack.c.l.b16 %v783
    %v1023 = vunpack.c.h.b16 %v783
    %v1024 = vunpack.c.l.b16 %v784
    %v1025 = vunpack.c.h.b16 %v784
    %v1026 = vunpack.c.l.b16 %v785
    %v1027 = vunpack.c.h.b16 %v785
    %v1028 = vunpack.c.l.b16 %v786
    %v1029 = vunpack.c.h.b16 %v786
    %v1030 = vunpack.c.l.b16 %v787
    %v1031 = vunpack.c.h.b16 %v787
    %v1032 = vunpack.c.l.b16 %v788
    %v1033 = vunpack.c.h.b16 %v788
    %v1034 = vunpack.c.l.b16 %v789
    %v1035 = vunpack.c.h.b16 %v789
    %v1036 = vunpack.c.l.b16 %v790
    %v1037 = vunpack.c.h.b16 %v790
    %v1038 = vunpack.c.l.b16 %v791
    %v1039 = vunpack.c.h.b16 %v791
    %v1040 = vunpack.c.l.b16 %v792
    %v1041 = vunpack.c.h.b16 %v792
    %v1042 = vunpack.c.l.b16 %v793
    %v1043 = vunpack.c.h.b16 %v793
    %v1044 = vunpack.c.l.b16 %v794
    %v1045 = vunpack.c.h.b16 %v794
    %v1046 = vunpack.c.l.b16 %v795
    %v1047 = vunpack.c.h.b16 %v795
    %v1048 = vunpack.c.l.b16 %v796
    %v1049 = vunpack.c.h.b16 %v796
    %v1050 = vunpack.c.l.b16 %v797
    %v1051 = vunpack.c.h.b16 %v797
    %v1052 = vunpack.c.l.b16 %v798
    %v1053 = vunpack.c.h.b16 %v798
    %v1054 = vunpack.c.l.b16 %v799
    %v1055 = vunpack.c.h.b16 %v799
    %v1056 = vunpack.c.l.b16 %v800
    %v1057 = vunpack.c.h.b16 %v800
    %v1058 = vunpack.c.l.b16 %v801
    %v1059 = vunpack.c.h.b16 %v801
    %v1060 = vunpack.c.l.b16 %v802
    %v1061 = vunpack.c.h.b16 %v802
    %v1062 = vunpack.c.l.b16 %v803
    %v1063 = vunpack.c.h.b16 %v803
    %v1064 = vunpack.c.l.b16 %v804
    %v1065 = vunpack.c.h.b16 %v804
    %v1066 = vunpack.c.l.b16 %v805
    %v1067 = vunpack.c.h.b16 %v805
    %v1068 = vunpack.c.l.b16 %v806
    %v1069 = vunpack.c.h.b16 %v806
    %v1070 = vunpack.c.l.b16 %v807
    %v1071 = vunpack.c.h.b16 %v807
    %v1072 = vunpack.c.l.b16 %v808
    %v1073 = vunpack.c.h.b16 %v808
    %v1074 = vunpack.c.l.b16 %v809
    %v1075 = vunpack.c.h.b16 %v809
    %v1076 = vunpack.c.l.b16 %v810
    %v1077 = vunpack.c.h.b16 %v810
    %v1078 = vunpack.c.l.b16 %v811
    %v1079 = vunpack.c.h.b16 %v811
    %v1080 = vunpack.c.l.b16 %v812
    %v1081 = vunpack.c.h.b16 %v812
    %v1082 = vunpack.c.l.b16 %v813
    %v1083 = vunpack.c.h.b16 %v813
    %v1084 = vunpack.c.l.b16 %v814
    %v1085 = vunpack.c.h.b16 %v814
    %v1086 = vunpack.c.l.b16 %v815
    %v1087 = vunpack.c.h.b16 %v815
    %v1088 = vunpack.c.l.b16 %v816
    %v1089 = vunpack.c.h.b16 %v816
    %v1090 = vunpack.c.l.b16 %v817
    %v1091 = vunpack.c.h.b16 %v817
    %v1092 = vunpack.c.l.b16 %v818
    %v1093 = vunpack.c.h.b16 %v818
    %v1094 = vunpack.c.l.b16 %v819
    %v1095 = vunpack.c.h.b16 %v819
    %v1096 = vunpack.c.l.b16 %v820
    %v1097 = vunpack.c.h.b16 %v820
    %v1098 = vunpack.c.l.b16 %v821
    %v1099 = vunpack.c.h.b16 %v821
    %v1100 = vunpack.c.l.b16 %v822
    %v1101 = vunpack.c.h.b16 %v822
    %v1102 = vunpack.c.l.b16 %v823
    %v1103 = vunpack.c.h.b16 %v823
    %v1104 = vunpack.c.l.b16 %v824
    %v1105 = vunpack.c.h.b16 %v824
    %v1106 = vunpack.c.l.b16 %v825
    %v1107 = vunpack.c.h.b16 %v825
    %v1108 = vunpack.c.l.b16 %v826
    %v1109 = vunpack.c.h.b16 %v826
    %v1110 = vunpack.c.l.b16 %v827
    %v1111 = vunpack.c.h.b16 %v827
    %v1112 = vunpack.c.l.b16 %v828
    %v1113 = vunpack.c.h.b16 %v828
    %v1114 = vunpack.c.l.b16 %v829
    %v1115 = vunpack.c.h.b16 %v829
    %v1116 = vunpack.c.l.b16 %v830
    %v1117 = vunpack.c.h.b16 %v830
    %v1118 = vunpack.c.l.b16 %v831
    %v1119 = vunpack.c.h.b16 %v831
    %v1120 = vunpack.c.l.b16 %v832
    %v1121 = vunpack.c.h.b16 %v832
    %v1122 = vunpack.c.l.b16 %v833
    %v1123 = vunpack.c.h.b16 %v833
    %v1124 = vunpack.c.l.b16 %v834
    %v1125 = vunpack.c.h.b16 %v834
    %v1126 = vunpack.c.l.b16 %v835
    %v1127 = vunpack.c.h.b16 %v835
    %v1128 = vunpack.c.l.b16 %v836
    %v1129 = vunpack.c.h.b16 %v836
    %v1130 = vunpack.c.l.b16 %v837
    %v1131 = vunpack.c.h.b16 %v837
    %v1132 = vunpack.c.l.b16 %v838
    %v1133 = vunpack.c.h.b16 %v838
    %v1134 = vunpack.c.l.b16 %v839
    %v1135 = vunpack.c.h.b16 %v839
    %v1136 = vunpack.c.l.b16 %v840
    %v1137 = vunpack.c.h.b16 %v840
    %v1138 = vunpack.c.l.b16 %v841
    %v1139 = vunpack.c.h.b16 %v841
    %v1140 = vunpack.c.l.b16 %v842
    %v1141 = vunpack.c.h.b16 %v842
    %v1142 = vunpack.c.l.b16 %v843
    %v1143 = vunpack.c.h.b16 %v843
    %v1144 = vunpack.c.l.b16 %v844
    %v1145 = vunpack.c.h.b16 %v844
    %v1146 = vunpack.c.l.b16 %v845
    %v1147 = vunpack.c.h.b16 %v845
    %v1148 = vunpack.c.l.b16 %v846
    %v1149 = vunpack.c.h.b16 %v846
    %v1150 = vpack.c.b16 %v964, %v958
    %v1151 = vpack.c.b16 %v965, %v959
    %v1152 = vpack.c.b16 %v966, %v960
    %v1153 = vpack.c.b16 %v967, %v961
    %v1154 = vpack.c.b16 %v968, %v962
    %v1155 = vpack.c.b16 %v969, %v963
    %v1156 = vpack.c.b16 %v976, %v970
    %v1157 = vpack.c.b16 %v977, %v971
    %v1158 = vpack.c.b16 %v978, %v972
    %v1159 = vpack.c.b16 %v979, %v973
    %v1160 = vpack.c.b16 %v980, %v974
    %v1161 = vpack.c.b16 %v981, %v975
    %v1162 = vpack.c.b16 %v988, %v982
    %v1163 = vpack.c.b16 %v989, %v983
    %v1164 = vpack.c.b16 %v990, %v984
    %v1165 = vpack.c.b16 %v991, %v985
    %v1166 = vpack.c.b16 %v992, %v986
    %v1167 = vpack.c.b16 %v993, %v987
    %v1168 = vpack.c.b16 %v1000, %v994
    %v1169 = vpack.c.b16 %v1001, %v995
    %v1170 = vpack.c.b16 %v1002, %v996
    %v1171 = vpack.c.b16 %v1003, %v997
    %v1172 = vpack.c.b16 %v1004, %v998
    %v1173 = vpack.c.b16 %v1005, %v999
    %v1174 = vpack.c.b16 %v1012, %v1006
    %v1175 = vpack.c.b16 %v1013, %v1007
    %v1176 = vpack.c.b16 %v1014, %v1008
    %v1177 = vpack.c.b16 %v1015, %v1009
    %v1178 = vpack.c.b16 %v1016, %v1010
    %v1179 = vpack.c.b16 %v1017, %v1011
    %v1180 = vpack.c.b16 %v1024, %v1018
    %v1181 = vpack.c.b16 %v1025, %v1019
    %v1182 = vpack.c.b16 %v1026, %v1020
    %v1183 = vpack.c.b16 %v1027, %v1021
    %v1184 = vpack.c.b16 %v1028, %v1022
    %v1185 = vpack.c.b16 %v1029, %v1023
    %v1186 = vpack.c.b16 %v1036, %v1030
    %v1187 = vpack.c.b16 %v1037, %v1031
    %v1188 = vpack.c.b16 %v1038, %v1032
    %v1189 = vpack.c.b16 %v1039, %v1033
    %v1190 = vpack.c.b16 %v1040, %v1034
    %v1191 = vpack.c.b16 %v1041, %v1035
    %v1192 = vpack.c.b16 %v1048, %v1042
    %v1193 = vpack.c.b16 %v1049, %v1043
    %v1194 = vpack.c.b16 %v1050, %v1044
    %v1195 = vpack.c.b16 %v1051, %v1045
    %v1196 = vpack.c.b16 %v1052, %v1046
    %v1197 = vpack.c.b16 %v1053, %v1047
    %v1198 = vpack.c.b16 %v1060, %v1054
    %v1199 = vpack.c.b16 %v1061, %v1055
    %v1200 = vpack.c.b16 %v1062, %v1056
    %v1201 = vpack.c.b16 %v1063, %v1057
    %v1202 = vpack.c.b16 %v1064, %v1058
    %v1203 = vpack.c.b16 %v1065, %v1059
    %v1204 = vpack.c.b16 %v1072, %v1066
    %v1205 = vpack.c.b16 %v1073, %v1067
    %v1206 = vpack.c.b16 %v1074, %v1068
    %v1207 = vpack.c.b16 %v1075, %v1069
    %v1208 = vpack.c.b16 %v1076, %v1070
    %v1209 = vpack.c.b16 %v1077, %v1071
    %v1210 = vpack.c.b16 %v1084, %v1078
    %v1211 = vpack.c.b16 %v1085, %v1079
    %v1212 = vpack.c.b16 %v1086, %v1080
    %v1213 = vpack.c.b16 %v1087, %v1081
    %v1214 = vpack.c.b16 %v1088, %v1082
    %v1215 = vpack.c.b16 %v1089, %v1083
    %v1216 = vpack.c.b16 %v1096, %v1090
    %v1217 = vpack.c.b16 %v1097, %v1091
    %v1218 = vpack.c.b16 %v1098, %v1092
    %v1219 = vpack.c.b16 %v1099, %v1093
    %v1220 = vpack.c.b16 %v1100, %v1094
    %v1221 = vpack.c.b16 %v1101, %v1095
    %v1222 = vpack.c.b16 %v1108, %v1102
    %v1223 = vpack.c.b16 %v1109, %v1103
    %v1224 = vpack.c.b16 %v1110, %v1104
    %v1225 = vpack.c.b16 %v1111, %v1105
    %v1226 = vpack.c.b16 %v1112, %v1106
    %v1227 = vpack.c.b16 %v1113, %v1107
    %v1228 = vpack.c.b16 %v1120, %v1114
    %v1229 = vpack.c.b16 %v1121, %v1115
    %v1230 = vpack.c.b16 %v1122, %v1116
    %v1231 = vpack.c.b16 %v1123, %v1117
    %v1232 = vpack.c.b16 %v1124, %v1118
    %v1233 = vpack.c.b16 %v1125, %v1119
    %v1234 = vpack.c.b16 %v1132, %v1126
    %v1235 = vpack.c.b16 %v1133, %v1127
    %v1236 = vpack.c.b16 %v1134, %v1128
    %v1237 = vpack.c.b16 %v1135, %v1129
    %v1238 = vpack.c.b16 %v1136, %v1130
    %v1239 = vpack.c.b16 %v1137, %v1131
    %v1240 = vpack.c.b16 %v1144, %v1138
    %v1241 = vpack.c.b16 %v1145, %v1139
    %v1242 = vpack.c.b16 %v1146, %v1140
    %v1243 = vpack.c.b16 %v1147, %v1141
    %v1244 = vpack.c.b16 %v1148, %v1142
    %v1245 = vpack.c.b16 %v1149, %v1143
    %1342 = vmatprep.subr.bf16.mxu0 %v1151
    %1343 = vmatpush1.bf16.msra.mxu0 %v1150
    %1344 = vmatprep.subr.bf16.mxu0 %v1157
    %1345 = vmatpush1.bf16.msra.mxu0 %v1156
    %1346 = vmatprep.subr.bf16.mxu0 %v1163
    %1347 = vmatpush1.bf16.msra.mxu0 %v1162
    %1348 = vmatprep.subr.bf16.mxu0 %v1169
    %1349 = vmatpush1.bf16.msra.mxu0 %v1168
    %1350 = vmatprep.subr.bf16.mxu0 %v1175
    %1351 = vmatpush1.bf16.msra.mxu0 %v1174
    %1352 = vmatprep.subr.bf16.mxu0 %v1181
    %1353 = vmatpush1.bf16.msra.mxu0 %v1180
    %1354 = vmatprep.subr.bf16.mxu0 %v1187
    %1355 = vmatpush1.bf16.msra.mxu0 %v1186
    %1356 = vmatprep.subr.bf16.mxu0 %v1193
    %1357 = vmatpush1.bf16.msra.mxu0 %v1192
    %1358 = vmatprep.subr.bf16.mxu0 %v1199
    %1359 = vmatpush1.bf16.msra.mxu0 %v1198
    %1360 = vmatprep.subr.bf16.mxu0 %v1205
    %1361 = vmatpush1.bf16.msra.mxu0 %v1204
    %1362 = vmatprep.subr.bf16.mxu0 %v1211
    %1363 = vmatpush1.bf16.msra.mxu0 %v1210
    %1364 = vmatprep.subr.bf16.mxu0 %v1217
    %1365 = vmatpush1.bf16.msra.mxu0 %v1216
    %1366 = vmatprep.subr.bf16.mxu0 %v1223
    %1367 = vmatpush1.bf16.msra.mxu0 %v1222
    %1368 = vmatprep.subr.bf16.mxu0 %v1229
    %1369 = vmatpush1.bf16.msra.mxu0 %v1228
    %1370 = vmatprep.subr.bf16.mxu0 %v1235
    %1371 = vmatpush1.bf16.msra.mxu0 %v1234
    %1372 = vmatprep.subr.bf16.mxu0 %v1241
    %1373 = vmatpush1.bf16.msra.mxu0 %v1240
    %1374 = vmatprep.mubr.bf16.mxu0 %v861
    %1375 = vmatmul.mubr.bf16.gmra.mrb[0].mxu0 %v860
    %v1376 = vpop.f32.mrb[0].mxu0
    %v1377 = vadd.f32 0.0, %v1376
    %v1378 = vpop.f32.mrb[0].mxu0
    %v1379 = vadd.f32 0.0, %v1378
    %v1380 = vpop.f32.mrb[0].mxu0
    %v1381 = vpop.f32.mrb[0].mxu0
    %1382 = vdwg.mxu0
    %1383 = vmatprep.subr.bf16.mxu0 %v1153
    %1384 = vmatpush1.bf16.msra.mxu0 %v1152
    %1385 = vmatprep.subr.bf16.mxu0 %v1159
    %1386 = vmatpush1.bf16.msra.mxu0 %v1158
    %1387 = vmatprep.subr.bf16.mxu0 %v1165
    %1388 = vmatpush1.bf16.msra.mxu0 %v1164
    %1389 = vmatprep.subr.bf16.mxu0 %v1171
    %1390 = vmatpush1.bf16.msra.mxu0 %v1170
    %1391 = vmatprep.subr.bf16.mxu0 %v1177
    %1392 = vmatpush1.bf16.msra.mxu0 %v1176
    %1393 = vmatprep.subr.bf16.mxu0 %v1183
    %1394 = vmatpush1.bf16.msra.mxu0 %v1182
    %1395 = vmatprep.subr.bf16.mxu0 %v1189
    %1396 = vmatpush1.bf16.msra.mxu0 %v1188
    %1397 = vmatprep.subr.bf16.mxu0 %v1195
    %1398 = vmatpush1.bf16.msra.mxu0 %v1194
    %1399 = vmatprep.subr.bf16.mxu0 %v1201
    %1400 = vmatpush1.bf16.msra.mxu0 %v1200
    %1401 = vmatprep.subr.bf16.mxu0 %v1207
    %1402 = vmatpush1.bf16.msra.mxu0 %v1206
    %1403 = vmatprep.subr.bf16.mxu0 %v1213
    %1404 = vmatpush1.bf16.msra.mxu0 %v1212
    %1405 = vmatprep.subr.bf16.mxu0 %v1219
    %1406 = vmatpush1.bf16.msra.mxu0 %v1218
    %1407 = vmatprep.subr.bf16.mxu0 %v1225
    %1408 = vmatpush1.bf16.msra.mxu0 %v1224
    %1409 = vmatprep.subr.bf16.mxu0 %v1231
    %1410 = vmatpush1.bf16.msra.mxu0 %v1230
    %1411 = vmatprep.subr.bf16.mxu0 %v1237
    %1412 = vmatpush1.bf16.msra.mxu0 %v1236
    %1413 = vmatprep.subr.bf16.mxu0 %v1243
    %1414 = vmatpush1.bf16.msra.mxu0 %v1242
    %1415 = vmatprep.mubr.bf16.mxu0 %v861
    %1416 = vmatmul.mubr.bf16.gmra.mrb[0].mxu0 %v860
    %v1417 = vpop.f32.mrb[0].mxu0
    %v1418 = vadd.f32 0.0, %v1417
    %v1419 = vpop.f32.mrb[0].mxu0
    %v1420 = vadd.f32 0.0, %v1419
    %v1421 = vpop.f32.mrb[0].mxu0
    %v1422 = vpop.f32.mrb[0].mxu0
    %1423 = vdwg.mxu0
    %1424 = vmatprep.subr.bf16.mxu0 %v1155
    %1425 = vmatpush1.bf16.msra.mxu0 %v1154
    %1426 = vmatprep.subr.bf16.mxu0 %v1161
    %1427 = vmatpush1.bf16.msra.mxu0 %v1160
    %1428 = vmatprep.subr.bf16.mxu0 %v1167
    %1429 = vmatpush1.bf16.msra.mxu0 %v1166
    %1430 = vmatprep.subr.bf16.mxu0 %v1173
    %1431 = vmatpush1.bf16.msra.mxu0 %v1172
    %1432 = vmatprep.subr.bf16.mxu0 %v1179
    %1433 = vmatpush1.bf16.msra.mxu0 %v1178
    %1434 = vmatprep.subr.bf16.mxu0 %v1185
    %1435 = vmatpush1.bf16.msra.mxu0 %v1184
    %1436 = vmatprep.subr.bf16.mxu0 %v1191
    %1437 = vmatpush1.bf16.msra.mxu0 %v1190
    %1438 = vmatprep.subr.bf16.mxu0 %v1197
    %1439 = vmatpush1.bf16.msra.mxu0 %v1196
    %1440 = vmatprep.subr.bf16.mxu0 %v1203
    %1441 = vmatpush1.bf16.msra.mxu0 %v1202
    %1442 = vmatprep.subr.bf16.mxu0 %v1209
    %1443 = vmatpush1.bf16.msra.mxu0 %v1208
    %1444 = vmatprep.subr.bf16.mxu0 %v1215
    %1445 = vmatpush1.bf16.msra.mxu0 %v1214
    %1446 = vmatprep.subr.bf16.mxu0 %v1221
    %1447 = vmatpush1.bf16.msra.mxu0 %v1220
    %1448 = vmatprep.subr.bf16.mxu0 %v1227
    %1449 = vmatpush1.bf16.msra.mxu0 %v1226
    %1450 = vmatprep.subr.bf16.mxu0 %v1233
    %1451 = vmatpush1.bf16.msra.mxu0 %v1232
    %1452 = vmatprep.subr.bf16.mxu0 %v1239
    %1453 = vmatpush1.bf16.msra.mxu0 %v1238
    %1454 = vmatprep.subr.bf16.mxu0 %v1245
    %1455 = vmatpush1.bf16.msra.mxu0 %v1244
    %1456 = vmatprep.mubr.bf16.mxu0 %v861
    %1457 = vmatmul.mubr.bf16.gmra.mrb[0].mxu0 %v860
    %v1458 = vpop.f32.mrb[0].mxu0
    %v1459 = vadd.f32 0.0, %v1458
    %v1460 = vpop.f32.mrb[0].mxu0
    %v1461 = vadd.f32 0.0, %v1460
    %v1462 = vpop.f32.mrb[0].mxu0
    %v1463 = vpop.f32.mrb[0].mxu0
    %1464 = vdwg.mxu0
    %v1465 = vadd.f32 %v663, %v1377
    %v1466 = vadd.f32 %v665, %v1379
    %v1467 = vadd.f32 %v704, %v1418
    %v1468 = vadd.f32 %v706, %v1420
    %v1470 = vlaneseq
    %v1471 = vshrl.u32 %v1470, 7
    %v1472 = vsub.s32 0, %v1471
    %v1473 = vrot.slane %v847, %v1472
    %v1474 = vlaneseq
    %v1475 = vshrl.u32 %v1474, 7
    %v1476 = vsub.s32 1, %v1475
    %v1477 = vrot.slane %v847, %v1476
    %v1478 = vlaneseq
    %v1479 = vshrl.u32 %v1478, 7
    %v1480 = vsub.s32 2, %v1479
    %v1481 = vrot.slane %v847, %v1480
    %v1482 = vlaneseq
    %v1483 = vshrl.u32 %v1482, 7
    %v1484 = vsub.s32 3, %v1483
    %v1485 = vrot.slane %v847, %v1484
    %v1490 = vadd.f32 %v1465, %v1473
    %v1491 = vadd.f32 %v1466, %v1477
    %v1492 = vadd.f32 %v1467, %v1481
    %v1493 = vadd.f32 %v1468, %v1485
    %v1494 = vxor.u32 %v1490, 2147483648
    %v1495 = vxor.u32 %v1491, 2147483648
    %v1496 = vxor.u32 %v1492, 2147483648
    %v1497 = vxor.u32 %v1493, 2147483648
    %v1498 = vmul.f32 %v1494, 1.442695
    %v1499 = vpow.pop %v1498
    %v1500 = vmul.f32 %v1495, 1.442695
    %v1501 = vpow.pop %v1500
    %v1502 = vmul.f32 %v1496, 1.442695
    %v1503 = vpow.pop %v1502
    %v1504 = vmul.f32 %v1497, 1.442695
    %v1505 = vpow.pop %v1504
    %v1506 = vadd.f32 %v1499, 1.0
    %v1507 = vadd.f32 %v1501, 1.0
    %v1508 = vadd.f32 %v1503, 1.0
    %v1509 = vadd.f32 %v1505, 1.0
    %v1510 = vrcp.pop %v1506
    %v1511 = vmul.f32 1.0, %v1510
    %v1512 = vrcp.pop %v1507
    %v1513 = vmul.f32 1.0, %v1512
    %v1514 = vrcp.pop %v1508
    %v1515 = vmul.f32 1.0, %v1514
    %v1516 = vrcp.pop %v1509
    %v1517 = vmul.f32 1.0, %v1516
    %v1518 = vlaneseq
    %v1519 = vshrl.u32 %v1518, 7
    %v1520 = vsub.s32 4, %v1519
    %v1521 = vrot.slane %v847, %v1520
    %v1522 = vlaneseq
    %v1523 = vshrl.u32 %v1522, 7
    %v1524 = vsub.s32 5, %v1523
    %v1525 = vrot.slane %v847, %v1524
    %v1528 = vadd.f32 %v745, %v1521
    %v1529 = vadd.f32 %v747, %v1525
    %v1530 = vlaneseq
    %v1531 = vshrl.u32 %v1530, 7
    %v1532 = vsub.s32 6, %v1531
    %v1533 = vrot.slane %v847, %v1532
    %v1534 = vlaneseq
    %v1535 = vshrl.u32 %v1534, 7
    %v1536 = vsub.s32 7, %v1535
    %v1537 = vrot.slane %v847, %v1536
    %v1540 = vadd.f32 %v1459, %v1533
    %v1541 = vadd.f32 %v1461, %v1537
    %v1542 = vmul.f32 %v1511, %v1540
    %v1543 = vmul.f32 %v1513, %v1541
    %v1544 = vadd.f32 %v1528, %v1542
    %v1545 = vadd.f32 %v1529, %v1543
    %v1546 = vtanh.pop %v1544
    %v1547 = vtanh.pop %v1545
    %v1548 = vsub.f32 1.0, %v1515
    %v1549 = vsub.f32 1.0, %v1517
    %v1550 = vmul.f32 %v1548, %v1546
    %v1551 = vmul.f32 %v1549, %v1547
    %v1552 = vmul.f32 %v1515, %v853
    %v1553 = vmul.f32 %v1517, %v857
    %v1554 = vadd.f32 %v1550, %v1552
    %v1555 = vadd.f32 %v1551, %v1553
    %v1556 = vpack.c.bf16 %v1554, %v1554
    %v1557 = vpack.c.bf16 %v1555, %v1555
    %1558 = vmatprep.subr.bf16.mxu0 %v1151
    %1559 = vmatpush1.bf16.msra.mxu0 %v1150
    %1560 = vmatprep.subr.bf16.mxu0 %v1157
    %1561 = vmatpush1.bf16.msra.mxu0 %v1156
    %1562 = vmatprep.subr.bf16.mxu0 %v1163
    %1563 = vmatpush1.bf16.msra.mxu0 %v1162
    %1564 = vmatprep.subr.bf16.mxu0 %v1169
    %1565 = vmatpush1.bf16.msra.mxu0 %v1168
    %1566 = vmatprep.subr.bf16.mxu0 %v1175
    %1567 = vmatpush1.bf16.msra.mxu0 %v1174
    %1568 = vmatprep.subr.bf16.mxu0 %v1181
    %1569 = vmatpush1.bf16.msra.mxu0 %v1180
    %1570 = vmatprep.subr.bf16.mxu0 %v1187
    %1571 = vmatpush1.bf16.msra.mxu0 %v1186
    %1572 = vmatprep.subr.bf16.mxu0 %v1193
    %1573 = vmatpush1.bf16.msra.mxu0 %v1192
    %1574 = vmatprep.subr.bf16.mxu0 %v1199
    %1575 = vmatpush1.bf16.msra.mxu0 %v1198
    %1576 = vmatprep.subr.bf16.mxu0 %v1205
    %1577 = vmatpush1.bf16.msra.mxu0 %v1204
    %1578 = vmatprep.subr.bf16.mxu0 %v1211
    %1579 = vmatpush1.bf16.msra.mxu0 %v1210
    %1580 = vmatprep.subr.bf16.mxu0 %v1217
    %1581 = vmatpush1.bf16.msra.mxu0 %v1216
    %1582 = vmatprep.subr.bf16.mxu0 %v1223
    %1583 = vmatpush1.bf16.msra.mxu0 %v1222
    %1584 = vmatprep.subr.bf16.mxu0 %v1229
    %1585 = vmatpush1.bf16.msra.mxu0 %v1228
    %1586 = vmatprep.subr.bf16.mxu0 %v1235
    %1587 = vmatpush1.bf16.msra.mxu0 %v1234
    %1588 = vmatprep.subr.bf16.mxu0 %v1241
    %1589 = vmatpush1.bf16.msra.mxu0 %v1240
    %1590 = vmatprep.mubr.bf16.mxu0 %v1557
    %1591 = vmatmul.mubr.bf16.gmra.mrb[0].mxu0 %v1556
    %v1592 = vpop.f32.mrb[0].mxu0
    %v1593 = vadd.f32 0.0, %v1592
    %v1594 = vpop.f32.mrb[0].mxu0
    %v1595 = vadd.f32 0.0, %v1594
    %v1596 = vpop.f32.mrb[0].mxu0
    %v1597 = vpop.f32.mrb[0].mxu0
    %1598 = vdwg.mxu0
    %1599 = vmatprep.subr.bf16.mxu0 %v1153
    %1600 = vmatpush1.bf16.msra.mxu0 %v1152
    %1601 = vmatprep.subr.bf16.mxu0 %v1159
    %1602 = vmatpush1.bf16.msra.mxu0 %v1158
    %1603 = vmatprep.subr.bf16.mxu0 %v1165
    %1604 = vmatpush1.bf16.msra.mxu0 %v1164
    %1605 = vmatprep.subr.bf16.mxu0 %v1171
    %1606 = vmatpush1.bf16.msra.mxu0 %v1170
    %1607 = vmatprep.subr.bf16.mxu0 %v1177
    %1608 = vmatpush1.bf16.msra.mxu0 %v1176
    %1609 = vmatprep.subr.bf16.mxu0 %v1183
    %1610 = vmatpush1.bf16.msra.mxu0 %v1182
    %1611 = vmatprep.subr.bf16.mxu0 %v1189
    %1612 = vmatpush1.bf16.msra.mxu0 %v1188
    %1613 = vmatprep.subr.bf16.mxu0 %v1195
    %1614 = vmatpush1.bf16.msra.mxu0 %v1194
    %1615 = vmatprep.subr.bf16.mxu0 %v1201
    %1616 = vmatpush1.bf16.msra.mxu0 %v1200
    %1617 = vmatprep.subr.bf16.mxu0 %v1207
    %1618 = vmatpush1.bf16.msra.mxu0 %v1206
    %1619 = vmatprep.subr.bf16.mxu0 %v1213
    %1620 = vmatpush1.bf16.msra.mxu0 %v1212
    %1621 = vmatprep.subr.bf16.mxu0 %v1219
    %1622 = vmatpush1.bf16.msra.mxu0 %v1218
    %1623 = vmatprep.subr.bf16.mxu0 %v1225
    %1624 = vmatpush1.bf16.msra.mxu0 %v1224
    %1625 = vmatprep.subr.bf16.mxu0 %v1231
    %1626 = vmatpush1.bf16.msra.mxu0 %v1230
    %1627 = vmatprep.subr.bf16.mxu0 %v1237
    %1628 = vmatpush1.bf16.msra.mxu0 %v1236
    %1629 = vmatprep.subr.bf16.mxu0 %v1243
    %1630 = vmatpush1.bf16.msra.mxu0 %v1242
    %1631 = vmatprep.mubr.bf16.mxu0 %v1557
    %1632 = vmatmul.mubr.bf16.gmra.mrb[0].mxu0 %v1556
    %v1633 = vpop.f32.mrb[0].mxu0
    %v1634 = vadd.f32 0.0, %v1633
    %v1635 = vpop.f32.mrb[0].mxu0
    %v1636 = vadd.f32 0.0, %v1635
    %v1637 = vpop.f32.mrb[0].mxu0
    %v1638 = vpop.f32.mrb[0].mxu0
    %1639 = vdwg.mxu0
    %1640 = vmatprep.subr.bf16.mxu0 %v1155
    %1641 = vmatpush1.bf16.msra.mxu0 %v1154
    %1642 = vmatprep.subr.bf16.mxu0 %v1161
    %1643 = vmatpush1.bf16.msra.mxu0 %v1160
    %1644 = vmatprep.subr.bf16.mxu0 %v1167
    %1645 = vmatpush1.bf16.msra.mxu0 %v1166
    %1646 = vmatprep.subr.bf16.mxu0 %v1173
    %1647 = vmatpush1.bf16.msra.mxu0 %v1172
    %1648 = vmatprep.subr.bf16.mxu0 %v1179
    %1649 = vmatpush1.bf16.msra.mxu0 %v1178
    %1650 = vmatprep.subr.bf16.mxu0 %v1185
    %1651 = vmatpush1.bf16.msra.mxu0 %v1184
    %1652 = vmatprep.subr.bf16.mxu0 %v1191
    %1653 = vmatpush1.bf16.msra.mxu0 %v1190
    %1654 = vmatprep.subr.bf16.mxu0 %v1197
    %1655 = vmatpush1.bf16.msra.mxu0 %v1196
    %1656 = vmatprep.subr.bf16.mxu0 %v1203
    %1657 = vmatpush1.bf16.msra.mxu0 %v1202
    %1658 = vmatprep.subr.bf16.mxu0 %v1209
    %1659 = vmatpush1.bf16.msra.mxu0 %v1208
    %1660 = vmatprep.subr.bf16.mxu0 %v1215
    %1661 = vmatpush1.bf16.msra.mxu0 %v1214
    %1662 = vmatprep.subr.bf16.mxu0 %v1221
    %1663 = vmatpush1.bf16.msra.mxu0 %v1220
    %1664 = vmatprep.subr.bf16.mxu0 %v1227
    %1665 = vmatpush1.bf16.msra.mxu0 %v1226
    %1666 = vmatprep.subr.bf16.mxu0 %v1233
    %1667 = vmatpush1.bf16.msra.mxu0 %v1232
    %1668 = vmatprep.subr.bf16.mxu0 %v1239
    %1669 = vmatpush1.bf16.msra.mxu0 %v1238
    %1670 = vmatprep.subr.bf16.mxu0 %v1245
    %1671 = vmatpush1.bf16.msra.mxu0 %v1244
    %1672 = vmatprep.mubr.bf16.mxu0 %v1557
    %1673 = vmatmul.mubr.bf16.gmra.mrb[0].mxu0 %v1556
    %v1674 = vpop.f32.mrb[0].mxu0
    %v1675 = vadd.f32 0.0, %v1674
    %v1676 = vpop.f32.mrb[0].mxu0
    %v1677 = vadd.f32 0.0, %v1676
    %v1678 = vpop.f32.mrb[0].mxu0
    %v1679 = vpop.f32.mrb[0].mxu0
    %1680 = vdwg.mxu0
    %v1685 = vrot.slane %v1593, 7
    %v1686 = vrot.slane %v1595, 7
    %v1687 = vrot.slane %v1634, 7
    %v1688 = vrot.slane %v1636, 7
    %v1693 = vadd.f32 %v663, %v1685
    %v1694 = vadd.f32 %v665, %v1686
    %v1695 = vadd.f32 %v704, %v1687
    %v1696 = vadd.f32 %v706, %v1688
    %v1697 = vadd.f32 %v1693, %v1473
    %v1698 = vadd.f32 %v1694, %v1477
    %v1699 = vadd.f32 %v1695, %v1481
    %v1700 = vadd.f32 %v1696, %v1485
    %v1701 = vxor.u32 %v1697, 2147483648
    %v1702 = vxor.u32 %v1698, 2147483648
    %v1703 = vxor.u32 %v1699, 2147483648
    %v1704 = vxor.u32 %v1700, 2147483648
    %v1705 = vmul.f32 %v1701, 1.442695
    %v1706 = vpow.pop %v1705
    %v1707 = vmul.f32 %v1702, 1.442695
    %v1708 = vpow.pop %v1707
    %v1709 = vmul.f32 %v1703, 1.442695
    %v1710 = vpow.pop %v1709
    %v1711 = vmul.f32 %v1704, 1.442695
    %v1712 = vpow.pop %v1711
    %v1713 = vadd.f32 %v1706, 1.0
    %v1714 = vadd.f32 %v1708, 1.0
    %v1715 = vadd.f32 %v1710, 1.0
    %v1716 = vadd.f32 %v1712, 1.0
    %v1717 = vrcp.pop %v1713
    %v1718 = vmul.f32 1.0, %v1717
    %v1719 = vrcp.pop %v1714
    %v1720 = vmul.f32 1.0, %v1719
    %v1721 = vrcp.pop %v1715
    %v1722 = vmul.f32 1.0, %v1721
    %v1723 = vrcp.pop %v1716
    %v1724 = vmul.f32 1.0, %v1723
    %v1725 = vadd.f32 %v1675, %v1533
    %v1726 = vadd.f32 %v1677, %v1537
    %v1729 = vrot.slane %v1725, 7
    %v1730 = vrot.slane %v1726, 7
    %v1733 = vmul.f32 %v1718, %v1729
    %v1734 = vmul.f32 %v1720, %v1730
    %v1735 = vadd.f32 %v1528, %v1733
    %v1736 = vadd.f32 %v1529, %v1734
    %v1737 = vtanh.pop %v1735
    %v1738 = vtanh.pop %v1736
    %v1739 = vsub.f32 1.0, %v1722
    %v1740 = vsub.f32 1.0, %v1724
    %v1741 = vmul.f32 %v1739, %v1737
    %v1742 = vmul.f32 %v1740, %v1738
    %v1745 = vrot.slane %v1554, 7
    %v1746 = vrot.slane %v1555, 7
    %v1749 = vmul.f32 %v1722, %v1745
    %v1750 = vmul.f32 %v1724, %v1746
    %v1751 = vadd.f32 %v1741, %v1749
    %v1752 = vadd.f32 %v1742, %v1750
    %v1753 = vpack.c.bf16 %v1751, %v1751
    %v1754 = vpack.c.bf16 %v1752, %v1752
    %v1756 = vshrl.u32 %v1753, 16
    %v1759 = vshrl.u32 %v1754, 16
    %1763 = vmatprep.subr.bf16.mxu0 %v1151
    %1764 = vmatpush1.bf16.msra.mxu0 %v1150
    %1765 = vmatprep.subr.bf16.mxu0 %v1157
    %1766 = vmatpush1.bf16.msra.mxu0 %v1156
    %1767 = vmatprep.subr.bf16.mxu0 %v1163
    %1768 = vmatpush1.bf16.msra.mxu0 %v1162
    %1769 = vmatprep.subr.bf16.mxu0 %v1169
    %1770 = vmatpush1.bf16.msra.mxu0 %v1168
    %1771 = vmatprep.subr.bf16.mxu0 %v1175
    %1772 = vmatpush1.bf16.msra.mxu0 %v1174
    %1773 = vmatprep.subr.bf16.mxu0 %v1181
    %1774 = vmatpush1.bf16.msra.mxu0 %v1180
    %1775 = vmatprep.subr.bf16.mxu0 %v1187
    %1776 = vmatpush1.bf16.msra.mxu0 %v1186
    %1777 = vmatprep.subr.bf16.mxu0 %v1193
    %1778 = vmatpush1.bf16.msra.mxu0 %v1192
    %1779 = vmatprep.subr.bf16.mxu0 %v1199
    %1780 = vmatpush1.bf16.msra.mxu0 %v1198
    %1781 = vmatprep.subr.bf16.mxu0 %v1205
    %1782 = vmatpush1.bf16.msra.mxu0 %v1204
    %1783 = vmatprep.subr.bf16.mxu0 %v1211
    %1784 = vmatpush1.bf16.msra.mxu0 %v1210
    %1785 = vmatprep.subr.bf16.mxu0 %v1217
    %1786 = vmatpush1.bf16.msra.mxu0 %v1216
    %1787 = vmatprep.subr.bf16.mxu0 %v1223
    %1788 = vmatpush1.bf16.msra.mxu0 %v1222
    %1789 = vmatprep.subr.bf16.mxu0 %v1229
    %1790 = vmatpush1.bf16.msra.mxu0 %v1228
    %1791 = vmatprep.subr.bf16.mxu0 %v1235
    %1792 = vmatpush1.bf16.msra.mxu0 %v1234
    %1793 = vmatprep.subr.bf16.mxu0 %v1241
    %1794 = vmatpush1.bf16.msra.mxu0 %v1240
    %1795 = vmatprep.mubr.bf16.mxu0 %v1759
    %1796 = vmatmul.mubr.bf16.gmra.mrb[0].mxu0 %v1756
    %v1797 = vpop.f32.mrb[0].mxu0
    %v1798 = vadd.f32 0.0, %v1797
    %v1799 = vpop.f32.mrb[0].mxu0
    %v1800 = vadd.f32 0.0, %v1799
    %v1801 = vpop.f32.mrb[0].mxu0
    %v1802 = vpop.f32.mrb[0].mxu0
    %1803 = vdwg.mxu0
    %1804 = vmatprep.subr.bf16.mxu0 %v1153
    %1805 = vmatpush1.bf16.msra.mxu0 %v1152
    %1806 = vmatprep.subr.bf16.mxu0 %v1159
    %1807 = vmatpush1.bf16.msra.mxu0 %v1158
    %1808 = vmatprep.subr.bf16.mxu0 %v1165
    %1809 = vmatpush1.bf16.msra.mxu0 %v1164
    %1810 = vmatprep.subr.bf16.mxu0 %v1171
    %1811 = vmatpush1.bf16.msra.mxu0 %v1170
    %1812 = vmatprep.subr.bf16.mxu0 %v1177
    %1813 = vmatpush1.bf16.msra.mxu0 %v1176
    %1814 = vmatprep.subr.bf16.mxu0 %v1183
    %1815 = vmatpush1.bf16.msra.mxu0 %v1182
    %1816 = vmatprep.subr.bf16.mxu0 %v1189
    %1817 = vmatpush1.bf16.msra.mxu0 %v1188
    %1818 = vmatprep.subr.bf16.mxu0 %v1195
    %1819 = vmatpush1.bf16.msra.mxu0 %v1194
    %1820 = vmatprep.subr.bf16.mxu0 %v1201
    %1821 = vmatpush1.bf16.msra.mxu0 %v1200
    %1822 = vmatprep.subr.bf16.mxu0 %v1207
    %1823 = vmatpush1.bf16.msra.mxu0 %v1206
    %1824 = vmatprep.subr.bf16.mxu0 %v1213
    %1825 = vmatpush1.bf16.msra.mxu0 %v1212
    %1826 = vmatprep.subr.bf16.mxu0 %v1219
    %1827 = vmatpush1.bf16.msra.mxu0 %v1218
    %1828 = vmatprep.subr.bf16.mxu0 %v1225
    %1829 = vmatpush1.bf16.msra.mxu0 %v1224
    %1830 = vmatprep.subr.bf16.mxu0 %v1231
    %1831 = vmatpush1.bf16.msra.mxu0 %v1230
    %1832 = vmatprep.subr.bf16.mxu0 %v1237
    %1833 = vmatpush1.bf16.msra.mxu0 %v1236
    %1834 = vmatprep.subr.bf16.mxu0 %v1243
    %1835 = vmatpush1.bf16.msra.mxu0 %v1242
    %1836 = vmatprep.mubr.bf16.mxu0 %v1759
    %1837 = vmatmul.mubr.bf16.gmra.mrb[0].mxu0 %v1756
    %v1838 = vpop.f32.mrb[0].mxu0
    %v1839 = vadd.f32 0.0, %v1838
    %v1840 = vpop.f32.mrb[0].mxu0
    %v1841 = vadd.f32 0.0, %v1840
    %v1842 = vpop.f32.mrb[0].mxu0
    %v1843 = vpop.f32.mrb[0].mxu0
    %1844 = vdwg.mxu0
    %1845 = vmatprep.subr.bf16.mxu0 %v1155
    %1846 = vmatpush1.bf16.msra.mxu0 %v1154
    %1847 = vmatprep.subr.bf16.mxu0 %v1161
    %1848 = vmatpush1.bf16.msra.mxu0 %v1160
    %1849 = vmatprep.subr.bf16.mxu0 %v1167
    %1850 = vmatpush1.bf16.msra.mxu0 %v1166
    %1851 = vmatprep.subr.bf16.mxu0 %v1173
    %1852 = vmatpush1.bf16.msra.mxu0 %v1172
    %1853 = vmatprep.subr.bf16.mxu0 %v1179
    %1854 = vmatpush1.bf16.msra.mxu0 %v1178
    %1855 = vmatprep.subr.bf16.mxu0 %v1185
    %1856 = vmatpush1.bf16.msra.mxu0 %v1184
    %1857 = vmatprep.subr.bf16.mxu0 %v1191
    %1858 = vmatpush1.bf16.msra.mxu0 %v1190
    %1859 = vmatprep.subr.bf16.mxu0 %v1197
    %1860 = vmatpush1.bf16.msra.mxu0 %v1196
    %1861 = vmatprep.subr.bf16.mxu0 %v1203
    %1862 = vmatpush1.bf16.msra.mxu0 %v1202
    %1863 = vmatprep.subr.bf16.mxu0 %v1209
    %1864 = vmatpush1.bf16.msra.mxu0 %v1208
    %1865 = vmatprep.subr.bf16.mxu0 %v1215
    %1866 = vmatpush1.bf16.msra.mxu0 %v1214
    %1867 = vmatprep.subr.bf16.mxu0 %v1221
    %1868 = vmatpush1.bf16.msra.mxu0 %v1220
    %1869 = vmatprep.subr.bf16.mxu0 %v1227
    %1870 = vmatpush1.bf16.msra.mxu0 %v1226
    %1871 = vmatprep.subr.bf16.mxu0 %v1233
    %1872 = vmatpush1.bf16.msra.mxu0 %v1232
    %1873 = vmatprep.subr.bf16.mxu0 %v1239
    %1874 = vmatpush1.bf16.msra.mxu0 %v1238
    %1875 = vmatprep.subr.bf16.mxu0 %v1245
    %1876 = vmatpush1.bf16.msra.mxu0 %v1244
    %1877 = vmatprep.mubr.bf16.mxu0 %v1759
    %1878 = vmatmul.mubr.bf16.gmra.mrb[0].mxu0 %v1756
    %v1879 = vpop.f32.mrb[0].mxu0
    %v1880 = vadd.f32 0.0, %v1879
    %v1881 = vpop.f32.mrb[0].mxu0
    %v1882 = vadd.f32 0.0, %v1881
    %v1883 = vpop.f32.mrb[0].mxu0
    %v1884 = vpop.f32.mrb[0].mxu0
    %1885 = vdwg.mxu0
    %v1890 = vrot.slane %v1798, 6
    %v1891 = vrot.slane %v1800, 6
    %v1892 = vrot.slane %v1839, 6
    %v1893 = vrot.slane %v1841, 6
    %v1898 = vadd.f32 %v663, %v1890
    %v1899 = vadd.f32 %v665, %v1891
    %v1900 = vadd.f32 %v704, %v1892
    %v1901 = vadd.f32 %v706, %v1893
    %v1902 = vadd.f32 %v1898, %v1473
    %v1903 = vadd.f32 %v1899, %v1477
    %v1904 = vadd.f32 %v1900, %v1481
    %v1905 = vadd.f32 %v1901, %v1485
    %v1906 = vxor.u32 %v1902, 2147483648
    %v1907 = vxor.u32 %v1903, 2147483648
    %v1908 = vxor.u32 %v1904, 2147483648
    %v1909 = vxor.u32 %v1905, 2147483648
    %v1910 = vmul.f32 %v1906, 1.442695
    %v1911 = vpow.pop %v1910
    %v1912 = vmul.f32 %v1907, 1.442695
    %v1913 = vpow.pop %v1912
    %v1914 = vmul.f32 %v1908, 1.442695
    %v1915 = vpow.pop %v1914
    %v1916 = vmul.f32 %v1909, 1.442695
    %v1917 = vpow.pop %v1916
    %v1918 = vadd.f32 %v1911, 1.0
    %v1919 = vadd.f32 %v1913, 1.0
    %v1920 = vadd.f32 %v1915, 1.0
    %v1921 = vadd.f32 %v1917, 1.0
    %v1922 = vrcp.pop %v1918
    %v1923 = vmul.f32 1.0, %v1922
    %v1924 = vrcp.pop %v1919
    %v1925 = vmul.f32 1.0, %v1924
    %v1926 = vrcp.pop %v1920
    %v1927 = vmul.f32 1.0, %v1926
    %v1928 = vrcp.pop %v1921
    %v1929 = vmul.f32 1.0, %v1928
    %v1930 = vadd.f32 %v1880, %v1533
    %v1931 = vadd.f32 %v1882, %v1537
    %v1934 = vrot.slane %v1930, 6
    %v1935 = vrot.slane %v1931, 6
    %v1938 = vmul.f32 %v1923, %v1934
    %v1939 = vmul.f32 %v1925, %v1935
    %v1940 = vadd.f32 %v1528, %v1938
    %v1941 = vadd.f32 %v1529, %v1939
    %v1942 = vtanh.pop %v1940
    %v1943 = vtanh.pop %v1941
    %v1944 = vsub.f32 1.0, %v1927
    %v1945 = vsub.f32 1.0, %v1929
    %v1946 = vmul.f32 %v1944, %v1942
    %v1947 = vmul.f32 %v1945, %v1943
    %v1950 = vrot.slane %v1751, 7
    %v1951 = vrot.slane %v1752, 7
    %v1954 = vmul.f32 %v1927, %v1950
    %v1955 = vmul.f32 %v1929, %v1951
    %v1956 = vadd.f32 %v1946, %v1954
    %v1957 = vadd.f32 %v1947, %v1955
    %v1958 = vpack.c.bf16 %v1956, %v1956
    %v1959 = vpack.c.bf16 %v1957, %v1957
    %v1962 = vrot.slane %v1958, 1
    %v1963 = vrot.slane %v1959, 1
    %1966 = vmatprep.subr.bf16.mxu0 %v1151
    %1967 = vmatpush1.bf16.msra.mxu0 %v1150
    %1968 = vmatprep.subr.bf16.mxu0 %v1157
    %1969 = vmatpush1.bf16.msra.mxu0 %v1156
    %1970 = vmatprep.subr.bf16.mxu0 %v1163
    %1971 = vmatpush1.bf16.msra.mxu0 %v1162
    %1972 = vmatprep.subr.bf16.mxu0 %v1169
    %1973 = vmatpush1.bf16.msra.mxu0 %v1168
    %1974 = vmatprep.subr.bf16.mxu0 %v1175
    %1975 = vmatpush1.bf16.msra.mxu0 %v1174
    %1976 = vmatprep.subr.bf16.mxu0 %v1181
    %1977 = vmatpush1.bf16.msra.mxu0 %v1180
    %1978 = vmatprep.subr.bf16.mxu0 %v1187
    %1979 = vmatpush1.bf16.msra.mxu0 %v1186
    %1980 = vmatprep.subr.bf16.mxu0 %v1193
    %1981 = vmatpush1.bf16.msra.mxu0 %v1192
    %1982 = vmatprep.subr.bf16.mxu0 %v1199
    %1983 = vmatpush1.bf16.msra.mxu0 %v1198
    %1984 = vmatprep.subr.bf16.mxu0 %v1205
    %1985 = vmatpush1.bf16.msra.mxu0 %v1204
    %1986 = vmatprep.subr.bf16.mxu0 %v1211
    %1987 = vmatpush1.bf16.msra.mxu0 %v1210
    %1988 = vmatprep.subr.bf16.mxu0 %v1217
    %1989 = vmatpush1.bf16.msra.mxu0 %v1216
    %1990 = vmatprep.subr.bf16.mxu0 %v1223
    %1991 = vmatpush1.bf16.msra.mxu0 %v1222
    %1992 = vmatprep.subr.bf16.mxu0 %v1229
    %1993 = vmatpush1.bf16.msra.mxu0 %v1228
    %1994 = vmatprep.subr.bf16.mxu0 %v1235
    %1995 = vmatpush1.bf16.msra.mxu0 %v1234
    %1996 = vmatprep.subr.bf16.mxu0 %v1241
    %1997 = vmatpush1.bf16.msra.mxu0 %v1240
    %1998 = vmatprep.mubr.bf16.mxu0 %v1963
    %1999 = vmatmul.mubr.bf16.gmra.mrb[0].mxu0 %v1962
    %v2000 = vpop.f32.mrb[0].mxu0
    %v2001 = vadd.f32 0.0, %v2000
    %v2002 = vpop.f32.mrb[0].mxu0
    %v2003 = vadd.f32 0.0, %v2002
    %v2004 = vpop.f32.mrb[0].mxu0
    %v2005 = vpop.f32.mrb[0].mxu0
    %2006 = vdwg.mxu0
    %2007 = vmatprep.subr.bf16.mxu0 %v1153
    %2008 = vmatpush1.bf16.msra.mxu0 %v1152
    %2009 = vmatprep.subr.bf16.mxu0 %v1159
    %2010 = vmatpush1.bf16.msra.mxu0 %v1158
    %2011 = vmatprep.subr.bf16.mxu0 %v1165
    %2012 = vmatpush1.bf16.msra.mxu0 %v1164
    %2013 = vmatprep.subr.bf16.mxu0 %v1171
    %2014 = vmatpush1.bf16.msra.mxu0 %v1170
    %2015 = vmatprep.subr.bf16.mxu0 %v1177
    %2016 = vmatpush1.bf16.msra.mxu0 %v1176
    %2017 = vmatprep.subr.bf16.mxu0 %v1183
    %2018 = vmatpush1.bf16.msra.mxu0 %v1182
    %2019 = vmatprep.subr.bf16.mxu0 %v1189
    %2020 = vmatpush1.bf16.msra.mxu0 %v1188
    %2021 = vmatprep.subr.bf16.mxu0 %v1195
    %2022 = vmatpush1.bf16.msra.mxu0 %v1194
    %2023 = vmatprep.subr.bf16.mxu0 %v1201
    %2024 = vmatpush1.bf16.msra.mxu0 %v1200
    %2025 = vmatprep.subr.bf16.mxu0 %v1207
    %2026 = vmatpush1.bf16.msra.mxu0 %v1206
    %2027 = vmatprep.subr.bf16.mxu0 %v1213
    %2028 = vmatpush1.bf16.msra.mxu0 %v1212
    %2029 = vmatprep.subr.bf16.mxu0 %v1219
    %2030 = vmatpush1.bf16.msra.mxu0 %v1218
    %2031 = vmatprep.subr.bf16.mxu0 %v1225
    %2032 = vmatpush1.bf16.msra.mxu0 %v1224
    %2033 = vmatprep.subr.bf16.mxu0 %v1231
    %2034 = vmatpush1.bf16.msra.mxu0 %v1230
    %2035 = vmatprep.subr.bf16.mxu0 %v1237
    %2036 = vmatpush1.bf16.msra.mxu0 %v1236
    %2037 = vmatprep.subr.bf16.mxu0 %v1243
    %2038 = vmatpush1.bf16.msra.mxu0 %v1242
    %2039 = vmatprep.mubr.bf16.mxu0 %v1963
    %2040 = vmatmul.mubr.bf16.gmra.mrb[0].mxu0 %v1962
    %v2041 = vpop.f32.mrb[0].mxu0
    %v2042 = vadd.f32 0.0, %v2041
    %v2043 = vpop.f32.mrb[0].mxu0
    %v2044 = vadd.f32 0.0, %v2043
    %v2045 = vpop.f32.mrb[0].mxu0
    %v2046 = vpop.f32.mrb[0].mxu0
    %2047 = vdwg.mxu0
    %2048 = vmatprep.subr.bf16.mxu0 %v1155
    %2049 = vmatpush1.bf16.msra.mxu0 %v1154
    %2050 = vmatprep.subr.bf16.mxu0 %v1161
    %2051 = vmatpush1.bf16.msra.mxu0 %v1160
    %2052 = vmatprep.subr.bf16.mxu0 %v1167
    %2053 = vmatpush1.bf16.msra.mxu0 %v1166
    %2054 = vmatprep.subr.bf16.mxu0 %v1173
    %2055 = vmatpush1.bf16.msra.mxu0 %v1172
    %2056 = vmatprep.subr.bf16.mxu0 %v1179
    %2057 = vmatpush1.bf16.msra.mxu0 %v1178
    %2058 = vmatprep.subr.bf16.mxu0 %v1185
    %2059 = vmatpush1.bf16.msra.mxu0 %v1184
    %2060 = vmatprep.subr.bf16.mxu0 %v1191
    %2061 = vmatpush1.bf16.msra.mxu0 %v1190
    %2062 = vmatprep.subr.bf16.mxu0 %v1197
    %2063 = vmatpush1.bf16.msra.mxu0 %v1196
    %2064 = vmatprep.subr.bf16.mxu0 %v1203
    %2065 = vmatpush1.bf16.msra.mxu0 %v1202
    %2066 = vmatprep.subr.bf16.mxu0 %v1209
    %2067 = vmatpush1.bf16.msra.mxu0 %v1208
    %2068 = vmatprep.subr.bf16.mxu0 %v1215
    %2069 = vmatpush1.bf16.msra.mxu0 %v1214
    %2070 = vmatprep.subr.bf16.mxu0 %v1221
    %2071 = vmatpush1.bf16.msra.mxu0 %v1220
    %2072 = vmatprep.subr.bf16.mxu0 %v1227
    %2073 = vmatpush1.bf16.msra.mxu0 %v1226
    %2074 = vmatprep.subr.bf16.mxu0 %v1233
    %2075 = vmatpush1.bf16.msra.mxu0 %v1232
    %2076 = vmatprep.subr.bf16.mxu0 %v1239
    %2077 = vmatpush1.bf16.msra.mxu0 %v1238
    %2078 = vmatprep.subr.bf16.mxu0 %v1245
    %2079 = vmatpush1.bf16.msra.mxu0 %v1244
    %2080 = vmatprep.mubr.bf16.mxu0 %v1963
    %2081 = vmatmul.mubr.bf16.gmra.mrb[0].mxu0 %v1962
    %v2082 = vpop.f32.mrb[0].mxu0
    %v2083 = vadd.f32 0.0, %v2082
    %v2084 = vpop.f32.mrb[0].mxu0
    %v2085 = vadd.f32 0.0, %v2084
    %v2086 = vpop.f32.mrb[0].mxu0
    %v2087 = vpop.f32.mrb[0].mxu0
    %2088 = vdwg.mxu0
    %v2093 = vrot.slane %v2001, 5
    %v2094 = vrot.slane %v2003, 5
    %v2095 = vrot.slane %v2042, 5
    %v2096 = vrot.slane %v2044, 5
    %v2101 = vadd.f32 %v663, %v2093
    %v2102 = vadd.f32 %v665, %v2094
    %v2103 = vadd.f32 %v704, %v2095
    %v2104 = vadd.f32 %v706, %v2096
    %v2105 = vadd.f32 %v2101, %v1473
    %v2106 = vadd.f32 %v2102, %v1477
    %v2107 = vadd.f32 %v2103, %v1481
    %v2108 = vadd.f32 %v2104, %v1485
    %v2109 = vxor.u32 %v2105, 2147483648
    %v2110 = vxor.u32 %v2106, 2147483648
    %v2111 = vxor.u32 %v2107, 2147483648
    %v2112 = vxor.u32 %v2108, 2147483648
    %v2113 = vmul.f32 %v2109, 1.442695
    %v2114 = vpow.pop %v2113
    %v2115 = vmul.f32 %v2110, 1.442695
    %v2116 = vpow.pop %v2115
    %v2117 = vmul.f32 %v2111, 1.442695
    %v2118 = vpow.pop %v2117
    %v2119 = vmul.f32 %v2112, 1.442695
    %v2120 = vpow.pop %v2119
    %v2121 = vadd.f32 %v2114, 1.0
    %v2122 = vadd.f32 %v2116, 1.0
    %v2123 = vadd.f32 %v2118, 1.0
    %v2124 = vadd.f32 %v2120, 1.0
    %v2125 = vrcp.pop %v2121
    %v2126 = vmul.f32 1.0, %v2125
    %v2127 = vrcp.pop %v2122
    %v2128 = vmul.f32 1.0, %v2127
    %v2129 = vrcp.pop %v2123
    %v2130 = vmul.f32 1.0, %v2129
    %v2131 = vrcp.pop %v2124
    %v2132 = vmul.f32 1.0, %v2131
    %v2133 = vadd.f32 %v2083, %v1533
    %v2134 = vadd.f32 %v2085, %v1537
    %v2137 = vrot.slane %v2133, 5
    %v2138 = vrot.slane %v2134, 5
    %v2141 = vmul.f32 %v2126, %v2137
    %v2142 = vmul.f32 %v2128, %v2138
    %v2143 = vadd.f32 %v1528, %v2141
    %v2144 = vadd.f32 %v1529, %v2142
    %v2145 = vtanh.pop %v2143
    %v2146 = vtanh.pop %v2144
    %v2147 = vsub.f32 1.0, %v2130
    %v2148 = vsub.f32 1.0, %v2132
    %v2149 = vmul.f32 %v2147, %v2145
    %v2150 = vmul.f32 %v2148, %v2146
    %v2153 = vrot.slane %v1956, 7
    %v2154 = vrot.slane %v1957, 7
    %v2157 = vmul.f32 %v2130, %v2153
    %v2158 = vmul.f32 %v2132, %v2154
    %v2159 = vadd.f32 %v2149, %v2157
    %v2160 = vadd.f32 %v2150, %v2158
    %v2161 = vpack.c.bf16 %v2159, %v2159
    %v2162 = vpack.c.bf16 %v2160, %v2160
    %v2164 = vshrl.u32 %v2161, 16
    %v2166 = vrot.slane %v2164, 1
    %v2168 = vshrl.u32 %v2162, 16
    %v2170 = vrot.slane %v2168, 1
    %2173 = vmatprep.subr.bf16.mxu0 %v1151
    %2174 = vmatpush1.bf16.msra.mxu0 %v1150
    %2175 = vmatprep.subr.bf16.mxu0 %v1157
    %2176 = vmatpush1.bf16.msra.mxu0 %v1156
    %2177 = vmatprep.subr.bf16.mxu0 %v1163
    %2178 = vmatpush1.bf16.msra.mxu0 %v1162
    %2179 = vmatprep.subr.bf16.mxu0 %v1169
    %2180 = vmatpush1.bf16.msra.mxu0 %v1168
    %2181 = vmatprep.subr.bf16.mxu0 %v1175
    %2182 = vmatpush1.bf16.msra.mxu0 %v1174
    %2183 = vmatprep.subr.bf16.mxu0 %v1181
    %2184 = vmatpush1.bf16.msra.mxu0 %v1180
    %2185 = vmatprep.subr.bf16.mxu0 %v1187
    %2186 = vmatpush1.bf16.msra.mxu0 %v1186
    %2187 = vmatprep.subr.bf16.mxu0 %v1193
    %2188 = vmatpush1.bf16.msra.mxu0 %v1192
    %2189 = vmatprep.subr.bf16.mxu0 %v1199
    %2190 = vmatpush1.bf16.msra.mxu0 %v1198
    %2191 = vmatprep.subr.bf16.mxu0 %v1205
    %2192 = vmatpush1.bf16.msra.mxu0 %v1204
    %2193 = vmatprep.subr.bf16.mxu0 %v1211
    %2194 = vmatpush1.bf16.msra.mxu0 %v1210
    %2195 = vmatprep.subr.bf16.mxu0 %v1217
    %2196 = vmatpush1.bf16.msra.mxu0 %v1216
    %2197 = vmatprep.subr.bf16.mxu0 %v1223
    %2198 = vmatpush1.bf16.msra.mxu0 %v1222
    %2199 = vmatprep.subr.bf16.mxu0 %v1229
    %2200 = vmatpush1.bf16.msra.mxu0 %v1228
    %2201 = vmatprep.subr.bf16.mxu0 %v1235
    %2202 = vmatpush1.bf16.msra.mxu0 %v1234
    %2203 = vmatprep.subr.bf16.mxu0 %v1241
    %2204 = vmatpush1.bf16.msra.mxu0 %v1240
    %2205 = vmatprep.mubr.bf16.mxu0 %v2170
    %2206 = vmatmul.mubr.bf16.gmra.mrb[0].mxu0 %v2166
    %v2207 = vpop.f32.mrb[0].mxu0
    %v2208 = vadd.f32 0.0, %v2207
    %v2209 = vpop.f32.mrb[0].mxu0
    %v2210 = vadd.f32 0.0, %v2209
    %v2211 = vpop.f32.mrb[0].mxu0
    %v2212 = vpop.f32.mrb[0].mxu0
    %2213 = vdwg.mxu0
    %2214 = vmatprep.subr.bf16.mxu0 %v1153
    %2215 = vmatpush1.bf16.msra.mxu0 %v1152
    %2216 = vmatprep.subr.bf16.mxu0 %v1159
    %2217 = vmatpush1.bf16.msra.mxu0 %v1158
    %2218 = vmatprep.subr.bf16.mxu0 %v1165
    %2219 = vmatpush1.bf16.msra.mxu0 %v1164
    %2220 = vmatprep.subr.bf16.mxu0 %v1171
    %2221 = vmatpush1.bf16.msra.mxu0 %v1170
    %2222 = vmatprep.subr.bf16.mxu0 %v1177
    %2223 = vmatpush1.bf16.msra.mxu0 %v1176
    %2224 = vmatprep.subr.bf16.mxu0 %v1183
    %2225 = vmatpush1.bf16.msra.mxu0 %v1182
    %2226 = vmatprep.subr.bf16.mxu0 %v1189
    %2227 = vmatpush1.bf16.msra.mxu0 %v1188
    %2228 = vmatprep.subr.bf16.mxu0 %v1195
    %2229 = vmatpush1.bf16.msra.mxu0 %v1194
    %2230 = vmatprep.subr.bf16.mxu0 %v1201
    %2231 = vmatpush1.bf16.msra.mxu0 %v1200
    %2232 = vmatprep.subr.bf16.mxu0 %v1207
    %2233 = vmatpush1.bf16.msra.mxu0 %v1206
    %2234 = vmatprep.subr.bf16.mxu0 %v1213
    %2235 = vmatpush1.bf16.msra.mxu0 %v1212
    %2236 = vmatprep.subr.bf16.mxu0 %v1219
    %2237 = vmatpush1.bf16.msra.mxu0 %v1218
    %2238 = vmatprep.subr.bf16.mxu0 %v1225
    %2239 = vmatpush1.bf16.msra.mxu0 %v1224
    %2240 = vmatprep.subr.bf16.mxu0 %v1231
    %2241 = vmatpush1.bf16.msra.mxu0 %v1230
    %2242 = vmatprep.subr.bf16.mxu0 %v1237
    %2243 = vmatpush1.bf16.msra.mxu0 %v1236
    %2244 = vmatprep.subr.bf16.mxu0 %v1243
    %2245 = vmatpush1.bf16.msra.mxu0 %v1242
    %2246 = vmatprep.mubr.bf16.mxu0 %v2170
    %2247 = vmatmul.mubr.bf16.gmra.mrb[0].mxu0 %v2166
    %v2248 = vpop.f32.mrb[0].mxu0
    %v2249 = vadd.f32 0.0, %v2248
    %v2250 = vpop.f32.mrb[0].mxu0
    %v2251 = vadd.f32 0.0, %v2250
    %v2252 = vpop.f32.mrb[0].mxu0
    %v2253 = vpop.f32.mrb[0].mxu0
    %2254 = vdwg.mxu0
    %2255 = vmatprep.subr.bf16.mxu0 %v1155
    %2256 = vmatpush1.bf16.msra.mxu0 %v1154
    %2257 = vmatprep.subr.bf16.mxu0 %v1161
    %2258 = vmatpush1.bf16.msra.mxu0 %v1160
    %2259 = vmatprep.subr.bf16.mxu0 %v1167
    %2260 = vmatpush1.bf16.msra.mxu0 %v1166
    %2261 = vmatprep.subr.bf16.mxu0 %v1173
    %2262 = vmatpush1.bf16.msra.mxu0 %v1172
    %2263 = vmatprep.subr.bf16.mxu0 %v1179
    %2264 = vmatpush1.bf16.msra.mxu0 %v1178
    %2265 = vmatprep.subr.bf16.mxu0 %v1185
    %2266 = vmatpush1.bf16.msra.mxu0 %v1184
    %2267 = vmatprep.subr.bf16.mxu0 %v1191
    %2268 = vmatpush1.bf16.msra.mxu0 %v1190
    %2269 = vmatprep.subr.bf16.mxu0 %v1197
    %2270 = vmatpush1.bf16.msra.mxu0 %v1196
    %2271 = vmatprep.subr.bf16.mxu0 %v1203
    %2272 = vmatpush1.bf16.msra.mxu0 %v1202
    %2273 = vmatprep.subr.bf16.mxu0 %v1209
    %2274 = vmatpush1.bf16.msra.mxu0 %v1208
    %2275 = vmatprep.subr.bf16.mxu0 %v1215
    %2276 = vmatpush1.bf16.msra.mxu0 %v1214
    %2277 = vmatprep.subr.bf16.mxu0 %v1221
    %2278 = vmatpush1.bf16.msra.mxu0 %v1220
    %2279 = vmatprep.subr.bf16.mxu0 %v1227
    %2280 = vmatpush1.bf16.msra.mxu0 %v1226
    %2281 = vmatprep.subr.bf16.mxu0 %v1233
    %2282 = vmatpush1.bf16.msra.mxu0 %v1232
    %2283 = vmatprep.subr.bf16.mxu0 %v1239
    %2284 = vmatpush1.bf16.msra.mxu0 %v1238
    %2285 = vmatprep.subr.bf16.mxu0 %v1245
    %2286 = vmatpush1.bf16.msra.mxu0 %v1244
    %2287 = vmatprep.mubr.bf16.mxu0 %v2170
    %2288 = vmatmul.mubr.bf16.gmra.mrb[0].mxu0 %v2166
    %v2289 = vpop.f32.mrb[0].mxu0
    %v2290 = vadd.f32 0.0, %v2289
    %v2291 = vpop.f32.mrb[0].mxu0
    %v2292 = vadd.f32 0.0, %v2291
    %v2293 = vpop.f32.mrb[0].mxu0
    %v2294 = vpop.f32.mrb[0].mxu0
    %2295 = vdwg.mxu0
    %v2300 = vrot.slane %v2208, 4
    %v2301 = vrot.slane %v2210, 4
    %v2302 = vrot.slane %v2249, 4
    %v2303 = vrot.slane %v2251, 4
    %v2308 = vadd.f32 %v663, %v2300
    %v2309 = vadd.f32 %v665, %v2301
    %v2310 = vadd.f32 %v704, %v2302
    %v2311 = vadd.f32 %v706, %v2303
    %v2312 = vadd.f32 %v2308, %v1473
    %v2313 = vadd.f32 %v2309, %v1477
    %v2314 = vadd.f32 %v2310, %v1481
    %v2315 = vadd.f32 %v2311, %v1485
    %v2316 = vxor.u32 %v2312, 2147483648
    %v2317 = vxor.u32 %v2313, 2147483648
    %v2318 = vxor.u32 %v2314, 2147483648
    %v2319 = vxor.u32 %v2315, 2147483648
    %v2320 = vmul.f32 %v2316, 1.442695
    %v2321 = vpow.pop %v2320
    %v2322 = vmul.f32 %v2317, 1.442695
    %v2323 = vpow.pop %v2322
    %v2324 = vmul.f32 %v2318, 1.442695
    %v2325 = vpow.pop %v2324
    %v2326 = vmul.f32 %v2319, 1.442695
    %v2327 = vpow.pop %v2326
    %v2328 = vadd.f32 %v2321, 1.0
    %v2329 = vadd.f32 %v2323, 1.0
    %v2330 = vadd.f32 %v2325, 1.0
    %v2331 = vadd.f32 %v2327, 1.0
    %v2332 = vrcp.pop %v2328
    %v2333 = vmul.f32 1.0, %v2332
    %v2334 = vrcp.pop %v2329
    %v2335 = vmul.f32 1.0, %v2334
    %v2336 = vrcp.pop %v2330
    %v2337 = vmul.f32 1.0, %v2336
    %v2338 = vrcp.pop %v2331
    %v2339 = vmul.f32 1.0, %v2338
    %v2340 = vadd.f32 %v2290, %v1533
    %v2341 = vadd.f32 %v2292, %v1537
    %v2344 = vrot.slane %v2340, 4
    %v2345 = vrot.slane %v2341, 4
    %v2348 = vmul.f32 %v2333, %v2344
    %v2349 = vmul.f32 %v2335, %v2345
    %v2350 = vadd.f32 %v1528, %v2348
    %v2351 = vadd.f32 %v1529, %v2349
    %v2352 = vtanh.pop %v2350
    %v2353 = vtanh.pop %v2351
    %v2354 = vsub.f32 1.0, %v2337
    %v2355 = vsub.f32 1.0, %v2339
    %v2356 = vmul.f32 %v2354, %v2352
    %v2357 = vmul.f32 %v2355, %v2353
    %v2360 = vrot.slane %v2159, 7
    %v2361 = vrot.slane %v2160, 7
    %v2364 = vmul.f32 %v2337, %v2360
    %v2365 = vmul.f32 %v2339, %v2361
    %v2366 = vadd.f32 %v2356, %v2364
    %v2367 = vadd.f32 %v2357, %v2365
    %v2368 = vpack.c.bf16 %v2366, %v2366
    %v2369 = vpack.c.bf16 %v2367, %v2367
    %v2372 = vrot.slane %v2368, 2
    %v2373 = vrot.slane %v2369, 2
    %2376 = vmatprep.subr.bf16.mxu0 %v1151
    %2377 = vmatpush1.bf16.msra.mxu0 %v1150
    %2378 = vmatprep.subr.bf16.mxu0 %v1157
    %2379 = vmatpush1.bf16.msra.mxu0 %v1156
    %2380 = vmatprep.subr.bf16.mxu0 %v1163
    %2381 = vmatpush1.bf16.msra.mxu0 %v1162
    %2382 = vmatprep.subr.bf16.mxu0 %v1169
    %2383 = vmatpush1.bf16.msra.mxu0 %v1168
    %2384 = vmatprep.subr.bf16.mxu0 %v1175
    %2385 = vmatpush1.bf16.msra.mxu0 %v1174
    %2386 = vmatprep.subr.bf16.mxu0 %v1181
    %2387 = vmatpush1.bf16.msra.mxu0 %v1180
    %2388 = vmatprep.subr.bf16.mxu0 %v1187
    %2389 = vmatpush1.bf16.msra.mxu0 %v1186
    %2390 = vmatprep.subr.bf16.mxu0 %v1193
    %2391 = vmatpush1.bf16.msra.mxu0 %v1192
    %2392 = vmatprep.subr.bf16.mxu0 %v1199
    %2393 = vmatpush1.bf16.msra.mxu0 %v1198
    %2394 = vmatprep.subr.bf16.mxu0 %v1205
    %2395 = vmatpush1.bf16.msra.mxu0 %v1204
    %2396 = vmatprep.subr.bf16.mxu0 %v1211
    %2397 = vmatpush1.bf16.msra.mxu0 %v1210
    %2398 = vmatprep.subr.bf16.mxu0 %v1217
    %2399 = vmatpush1.bf16.msra.mxu0 %v1216
    %2400 = vmatprep.subr.bf16.mxu0 %v1223
    %2401 = vmatpush1.bf16.msra.mxu0 %v1222
    %2402 = vmatprep.subr.bf16.mxu0 %v1229
    %2403 = vmatpush1.bf16.msra.mxu0 %v1228
    %2404 = vmatprep.subr.bf16.mxu0 %v1235
    %2405 = vmatpush1.bf16.msra.mxu0 %v1234
    %2406 = vmatprep.subr.bf16.mxu0 %v1241
    %2407 = vmatpush1.bf16.msra.mxu0 %v1240
    %2408 = vmatprep.mubr.bf16.mxu0 %v2373
    %2409 = vmatmul.mubr.bf16.gmra.mrb[0].mxu0 %v2372
    %v2410 = vpop.f32.mrb[0].mxu0
    %v2411 = vadd.f32 0.0, %v2410
    %v2412 = vpop.f32.mrb[0].mxu0
    %v2413 = vadd.f32 0.0, %v2412
    %v2414 = vpop.f32.mrb[0].mxu0
    %v2415 = vpop.f32.mrb[0].mxu0
    %2416 = vdwg.mxu0
    %2417 = vmatprep.subr.bf16.mxu0 %v1153
    %2418 = vmatpush1.bf16.msra.mxu0 %v1152
    %2419 = vmatprep.subr.bf16.mxu0 %v1159
    %2420 = vmatpush1.bf16.msra.mxu0 %v1158
    %2421 = vmatprep.subr.bf16.mxu0 %v1165
    %2422 = vmatpush1.bf16.msra.mxu0 %v1164
    %2423 = vmatprep.subr.bf16.mxu0 %v1171
    %2424 = vmatpush1.bf16.msra.mxu0 %v1170
    %2425 = vmatprep.subr.bf16.mxu0 %v1177
    %2426 = vmatpush1.bf16.msra.mxu0 %v1176
    %2427 = vmatprep.subr.bf16.mxu0 %v1183
    %2428 = vmatpush1.bf16.msra.mxu0 %v1182
    %2429 = vmatprep.subr.bf16.mxu0 %v1189
    %2430 = vmatpush1.bf16.msra.mxu0 %v1188
    %2431 = vmatprep.subr.bf16.mxu0 %v1195
    %2432 = vmatpush1.bf16.msra.mxu0 %v1194
    %2433 = vmatprep.subr.bf16.mxu0 %v1201
    %2434 = vmatpush1.bf16.msra.mxu0 %v1200
    %2435 = vmatprep.subr.bf16.mxu0 %v1207
    %2436 = vmatpush1.bf16.msra.mxu0 %v1206
    %2437 = vmatprep.subr.bf16.mxu0 %v1213
    %2438 = vmatpush1.bf16.msra.mxu0 %v1212
    %2439 = vmatprep.subr.bf16.mxu0 %v1219
    %2440 = vmatpush1.bf16.msra.mxu0 %v1218
    %2441 = vmatprep.subr.bf16.mxu0 %v1225
    %2442 = vmatpush1.bf16.msra.mxu0 %v1224
    %2443 = vmatprep.subr.bf16.mxu0 %v1231
    %2444 = vmatpush1.bf16.msra.mxu0 %v1230
    %2445 = vmatprep.subr.bf16.mxu0 %v1237
    %2446 = vmatpush1.bf16.msra.mxu0 %v1236
    %2447 = vmatprep.subr.bf16.mxu0 %v1243
    %2448 = vmatpush1.bf16.msra.mxu0 %v1242
    %2449 = vmatprep.mubr.bf16.mxu0 %v2373
    %2450 = vmatmul.mubr.bf16.gmra.mrb[0].mxu0 %v2372
    %v2451 = vpop.f32.mrb[0].mxu0
    %v2452 = vadd.f32 0.0, %v2451
    %v2453 = vpop.f32.mrb[0].mxu0
    %v2454 = vadd.f32 0.0, %v2453
    %v2455 = vpop.f32.mrb[0].mxu0
    %v2456 = vpop.f32.mrb[0].mxu0
    %2457 = vdwg.mxu0
    %2458 = vmatprep.subr.bf16.mxu0 %v1155
    %2459 = vmatpush1.bf16.msra.mxu0 %v1154
    %2460 = vmatprep.subr.bf16.mxu0 %v1161
    %2461 = vmatpush1.bf16.msra.mxu0 %v1160
    %2462 = vmatprep.subr.bf16.mxu0 %v1167
    %2463 = vmatpush1.bf16.msra.mxu0 %v1166
    %2464 = vmatprep.subr.bf16.mxu0 %v1173
    %2465 = vmatpush1.bf16.msra.mxu0 %v1172
    %2466 = vmatprep.subr.bf16.mxu0 %v1179
    %2467 = vmatpush1.bf16.msra.mxu0 %v1178
    %2468 = vmatprep.subr.bf16.mxu0 %v1185
    %2469 = vmatpush1.bf16.msra.mxu0 %v1184
    %2470 = vmatprep.subr.bf16.mxu0 %v1191
    %2471 = vmatpush1.bf16.msra.mxu0 %v1190
    %2472 = vmatprep.subr.bf16.mxu0 %v1197
    %2473 = vmatpush1.bf16.msra.mxu0 %v1196
    %2474 = vmatprep.subr.bf16.mxu0 %v1203
    %2475 = vmatpush1.bf16.msra.mxu0 %v1202
    %2476 = vmatprep.subr.bf16.mxu0 %v1209
    %2477 = vmatpush1.bf16.msra.mxu0 %v1208
    %2478 = vmatprep.subr.bf16.mxu0 %v1215
    %2479 = vmatpush1.bf16.msra.mxu0 %v1214
    %2480 = vmatprep.subr.bf16.mxu0 %v1221
    %2481 = vmatpush1.bf16.msra.mxu0 %v1220
    %2482 = vmatprep.subr.bf16.mxu0 %v1227
    %2483 = vmatpush1.bf16.msra.mxu0 %v1226
    %2484 = vmatprep.subr.bf16.mxu0 %v1233
    %2485 = vmatpush1.bf16.msra.mxu0 %v1232
    %2486 = vmatprep.subr.bf16.mxu0 %v1239
    %2487 = vmatpush1.bf16.msra.mxu0 %v1238
    %2488 = vmatprep.subr.bf16.mxu0 %v1245
    %2489 = vmatpush1.bf16.msra.mxu0 %v1244
    %2490 = vmatprep.mubr.bf16.mxu0 %v2373
    %2491 = vmatmul.mubr.bf16.gmra.mrb[0].mxu0 %v2372
    %v2492 = vpop.f32.mrb[0].mxu0
    %v2493 = vadd.f32 0.0, %v2492
    %v2494 = vpop.f32.mrb[0].mxu0
    %v2495 = vadd.f32 0.0, %v2494
    %v2496 = vpop.f32.mrb[0].mxu0
    %v2497 = vpop.f32.mrb[0].mxu0
    %2498 = vdwg.mxu0
    %v2503 = vrot.slane %v2411, 3
    %v2504 = vrot.slane %v2413, 3
    %v2505 = vrot.slane %v2452, 3
    %v2506 = vrot.slane %v2454, 3
    %v2511 = vadd.f32 %v663, %v2503
    %v2512 = vadd.f32 %v665, %v2504
    %v2513 = vadd.f32 %v704, %v2505
    %v2514 = vadd.f32 %v706, %v2506
    %v2515 = vadd.f32 %v2511, %v1473
    %v2516 = vadd.f32 %v2512, %v1477
    %v2517 = vadd.f32 %v2513, %v1481
    %v2518 = vadd.f32 %v2514, %v1485
    %v2519 = vxor.u32 %v2515, 2147483648
    %v2520 = vxor.u32 %v2516, 2147483648
    %v2521 = vxor.u32 %v2517, 2147483648
    %v2522 = vxor.u32 %v2518, 2147483648
    %v2523 = vmul.f32 %v2519, 1.442695
    %v2524 = vpow.pop %v2523
    %v2525 = vmul.f32 %v2520, 1.442695
    %v2526 = vpow.pop %v2525
    %v2527 = vmul.f32 %v2521, 1.442695
    %v2528 = vpow.pop %v2527
    %v2529 = vmul.f32 %v2522, 1.442695
    %v2530 = vpow.pop %v2529
    %v2531 = vadd.f32 %v2524, 1.0
    %v2532 = vadd.f32 %v2526, 1.0
    %v2533 = vadd.f32 %v2528, 1.0
    %v2534 = vadd.f32 %v2530, 1.0
    %v2535 = vrcp.pop %v2531
    %v2536 = vmul.f32 1.0, %v2535
    %v2537 = vrcp.pop %v2532
    %v2538 = vmul.f32 1.0, %v2537
    %v2539 = vrcp.pop %v2533
    %v2540 = vmul.f32 1.0, %v2539
    %v2541 = vrcp.pop %v2534
    %v2542 = vmul.f32 1.0, %v2541
    %v2543 = vadd.f32 %v2493, %v1533
    %v2544 = vadd.f32 %v2495, %v1537
    %v2547 = vrot.slane %v2543, 3
    %v2548 = vrot.slane %v2544, 3
    %v2551 = vmul.f32 %v2536, %v2547
    %v2552 = vmul.f32 %v2538, %v2548
    %v2553 = vadd.f32 %v1528, %v2551
    %v2554 = vadd.f32 %v1529, %v2552
    %v2555 = vtanh.pop %v2553
    %v2556 = vtanh.pop %v2554
    %v2557 = vsub.f32 1.0, %v2540
    %v2558 = vsub.f32 1.0, %v2542
    %v2559 = vmul.f32 %v2557, %v2555
    %v2560 = vmul.f32 %v2558, %v2556
    %v2563 = vrot.slane %v2366, 7
    %v2564 = vrot.slane %v2367, 7
    %v2567 = vmul.f32 %v2540, %v2563
    %v2568 = vmul.f32 %v2542, %v2564
    %v2569 = vadd.f32 %v2559, %v2567
    %v2570 = vadd.f32 %v2560, %v2568
    %v2571 = vpack.c.bf16 %v2569, %v2569
    %v2572 = vpack.c.bf16 %v2570, %v2570
    %v2574 = vshrl.u32 %v2571, 16
    %v2576 = vrot.slane %v2574, 2
    %v2578 = vshrl.u32 %v2572, 16
    %v2580 = vrot.slane %v2578, 2
    %2583 = vmatprep.subr.bf16.mxu0 %v1151
    %2584 = vmatpush1.bf16.msra.mxu0 %v1150
    %2585 = vmatprep.subr.bf16.mxu0 %v1157
    %2586 = vmatpush1.bf16.msra.mxu0 %v1156
    %2587 = vmatprep.subr.bf16.mxu0 %v1163
    %2588 = vmatpush1.bf16.msra.mxu0 %v1162
    %2589 = vmatprep.subr.bf16.mxu0 %v1169
    %2590 = vmatpush1.bf16.msra.mxu0 %v1168
    %2591 = vmatprep.subr.bf16.mxu0 %v1175
    %2592 = vmatpush1.bf16.msra.mxu0 %v1174
    %2593 = vmatprep.subr.bf16.mxu0 %v1181
    %2594 = vmatpush1.bf16.msra.mxu0 %v1180
    %2595 = vmatprep.subr.bf16.mxu0 %v1187
    %2596 = vmatpush1.bf16.msra.mxu0 %v1186
    %2597 = vmatprep.subr.bf16.mxu0 %v1193
    %2598 = vmatpush1.bf16.msra.mxu0 %v1192
    %2599 = vmatprep.subr.bf16.mxu0 %v1199
    %2600 = vmatpush1.bf16.msra.mxu0 %v1198
    %2601 = vmatprep.subr.bf16.mxu0 %v1205
    %2602 = vmatpush1.bf16.msra.mxu0 %v1204
    %2603 = vmatprep.subr.bf16.mxu0 %v1211
    %2604 = vmatpush1.bf16.msra.mxu0 %v1210
    %2605 = vmatprep.subr.bf16.mxu0 %v1217
    %2606 = vmatpush1.bf16.msra.mxu0 %v1216
    %2607 = vmatprep.subr.bf16.mxu0 %v1223
    %2608 = vmatpush1.bf16.msra.mxu0 %v1222
    %2609 = vmatprep.subr.bf16.mxu0 %v1229
    %2610 = vmatpush1.bf16.msra.mxu0 %v1228
    %2611 = vmatprep.subr.bf16.mxu0 %v1235
    %2612 = vmatpush1.bf16.msra.mxu0 %v1234
    %2613 = vmatprep.subr.bf16.mxu0 %v1241
    %2614 = vmatpush1.bf16.msra.mxu0 %v1240
    %2615 = vmatprep.mubr.bf16.mxu0 %v2580
    %2616 = vmatmul.mubr.bf16.gmra.mrb[0].mxu0 %v2576
    %v2617 = vpop.f32.mrb[0].mxu0
    %v2618 = vadd.f32 0.0, %v2617
    %v2619 = vpop.f32.mrb[0].mxu0
    %v2620 = vadd.f32 0.0, %v2619
    %v2621 = vpop.f32.mrb[0].mxu0
    %v2622 = vpop.f32.mrb[0].mxu0
    %2623 = vdwg.mxu0
    %2624 = vmatprep.subr.bf16.mxu0 %v1153
    %2625 = vmatpush1.bf16.msra.mxu0 %v1152
    %2626 = vmatprep.subr.bf16.mxu0 %v1159
    %2627 = vmatpush1.bf16.msra.mxu0 %v1158
    %2628 = vmatprep.subr.bf16.mxu0 %v1165
    %2629 = vmatpush1.bf16.msra.mxu0 %v1164
    %2630 = vmatprep.subr.bf16.mxu0 %v1171
    %2631 = vmatpush1.bf16.msra.mxu0 %v1170
    %2632 = vmatprep.subr.bf16.mxu0 %v1177
    %2633 = vmatpush1.bf16.msra.mxu0 %v1176
    %2634 = vmatprep.subr.bf16.mxu0 %v1183
    %2635 = vmatpush1.bf16.msra.mxu0 %v1182
    %2636 = vmatprep.subr.bf16.mxu0 %v1189
    %2637 = vmatpush1.bf16.msra.mxu0 %v1188
    %2638 = vmatprep.subr.bf16.mxu0 %v1195
    %2639 = vmatpush1.bf16.msra.mxu0 %v1194
    %2640 = vmatprep.subr.bf16.mxu0 %v1201
    %2641 = vmatpush1.bf16.msra.mxu0 %v1200
    %2642 = vmatprep.subr.bf16.mxu0 %v1207
    %2643 = vmatpush1.bf16.msra.mxu0 %v1206
    %2644 = vmatprep.subr.bf16.mxu0 %v1213
    %2645 = vmatpush1.bf16.msra.mxu0 %v1212
    %2646 = vmatprep.subr.bf16.mxu0 %v1219
    %2647 = vmatpush1.bf16.msra.mxu0 %v1218
    %2648 = vmatprep.subr.bf16.mxu0 %v1225
    %2649 = vmatpush1.bf16.msra.mxu0 %v1224
    %2650 = vmatprep.subr.bf16.mxu0 %v1231
    %2651 = vmatpush1.bf16.msra.mxu0 %v1230
    %2652 = vmatprep.subr.bf16.mxu0 %v1237
    %2653 = vmatpush1.bf16.msra.mxu0 %v1236
    %2654 = vmatprep.subr.bf16.mxu0 %v1243
    %2655 = vmatpush1.bf16.msra.mxu0 %v1242
    %2656 = vmatprep.mubr.bf16.mxu0 %v2580
    %2657 = vmatmul.mubr.bf16.gmra.mrb[0].mxu0 %v2576
    %v2658 = vpop.f32.mrb[0].mxu0
    %v2659 = vadd.f32 0.0, %v2658
    %v2660 = vpop.f32.mrb[0].mxu0
    %v2661 = vadd.f32 0.0, %v2660
    %v2662 = vpop.f32.mrb[0].mxu0
    %v2663 = vpop.f32.mrb[0].mxu0
    %2664 = vdwg.mxu0
    %2665 = vmatprep.subr.bf16.mxu0 %v1155
    %2666 = vmatpush1.bf16.msra.mxu0 %v1154
    %2667 = vmatprep.subr.bf16.mxu0 %v1161
    %2668 = vmatpush1.bf16.msra.mxu0 %v1160
    %2669 = vmatprep.subr.bf16.mxu0 %v1167
    %2670 = vmatpush1.bf16.msra.mxu0 %v1166
    %2671 = vmatprep.subr.bf16.mxu0 %v1173
    %2672 = vmatpush1.bf16.msra.mxu0 %v1172
    %2673 = vmatprep.subr.bf16.mxu0 %v1179
    %2674 = vmatpush1.bf16.msra.mxu0 %v1178
    %2675 = vmatprep.subr.bf16.mxu0 %v1185
    %2676 = vmatpush1.bf16.msra.mxu0 %v1184
    %2677 = vmatprep.subr.bf16.mxu0 %v1191
    %2678 = vmatpush1.bf16.msra.mxu0 %v1190
    %2679 = vmatprep.subr.bf16.mxu0 %v1197
    %2680 = vmatpush1.bf16.msra.mxu0 %v1196
    %2681 = vmatprep.subr.bf16.mxu0 %v1203
    %2682 = vmatpush1.bf16.msra.mxu0 %v1202
    %2683 = vmatprep.subr.bf16.mxu0 %v1209
    %2684 = vmatpush1.bf16.msra.mxu0 %v1208
    %2685 = vmatprep.subr.bf16.mxu0 %v1215
    %2686 = vmatpush1.bf16.msra.mxu0 %v1214
    %2687 = vmatprep.subr.bf16.mxu0 %v1221
    %2688 = vmatpush1.bf16.msra.mxu0 %v1220
    %2689 = vmatprep.subr.bf16.mxu0 %v1227
    %2690 = vmatpush1.bf16.msra.mxu0 %v1226
    %2691 = vmatprep.subr.bf16.mxu0 %v1233
    %2692 = vmatpush1.bf16.msra.mxu0 %v1232
    %2693 = vmatprep.subr.bf16.mxu0 %v1239
    %2694 = vmatpush1.bf16.msra.mxu0 %v1238
    %2695 = vmatprep.subr.bf16.mxu0 %v1245
    %2696 = vmatpush1.bf16.msra.mxu0 %v1244
    %2697 = vmatprep.mubr.bf16.mxu0 %v2580
    %2698 = vmatmul.mubr.bf16.gmra.mrb[0].mxu0 %v2576
    %v2699 = vpop.f32.mrb[0].mxu0
    %v2700 = vadd.f32 0.0, %v2699
    %v2701 = vpop.f32.mrb[0].mxu0
    %v2702 = vadd.f32 0.0, %v2701
    %v2703 = vpop.f32.mrb[0].mxu0
    %v2704 = vpop.f32.mrb[0].mxu0
    %2705 = vdwg.mxu0
    %v2710 = vrot.slane %v2618, 2
    %v2711 = vrot.slane %v2620, 2
    %v2712 = vrot.slane %v2659, 2
    %v2713 = vrot.slane %v2661, 2
    %v2718 = vadd.f32 %v663, %v2710
    %v2719 = vadd.f32 %v665, %v2711
    %v2720 = vadd.f32 %v704, %v2712
    %v2721 = vadd.f32 %v706, %v2713
    %v2722 = vadd.f32 %v2718, %v1473
    %v2723 = vadd.f32 %v2719, %v1477
    %v2724 = vadd.f32 %v2720, %v1481
    %v2725 = vadd.f32 %v2721, %v1485
    %v2726 = vxor.u32 %v2722, 2147483648
    %v2727 = vxor.u32 %v2723, 2147483648
    %v2728 = vxor.u32 %v2724, 2147483648
    %v2729 = vxor.u32 %v2725, 2147483648
    %v2730 = vmul.f32 %v2726, 1.442695
    %v2731 = vpow.pop %v2730
    %v2732 = vmul.f32 %v2727, 1.442695
    %v2733 = vpow.pop %v2732
    %v2734 = vmul.f32 %v2728, 1.442695
    %v2735 = vpow.pop %v2734
    %v2736 = vmul.f32 %v2729, 1.442695
    %v2737 = vpow.pop %v2736
    %v2738 = vadd.f32 %v2731, 1.0
    %v2739 = vadd.f32 %v2733, 1.0
    %v2740 = vadd.f32 %v2735, 1.0
    %v2741 = vadd.f32 %v2737, 1.0
    %v2742 = vrcp.pop %v2738
    %v2743 = vmul.f32 1.0, %v2742
    %v2744 = vrcp.pop %v2739
    %v2745 = vmul.f32 1.0, %v2744
    %v2746 = vrcp.pop %v2740
    %v2747 = vmul.f32 1.0, %v2746
    %v2748 = vrcp.pop %v2741
    %v2749 = vmul.f32 1.0, %v2748
    %v2750 = vadd.f32 %v2700, %v1533
    %v2751 = vadd.f32 %v2702, %v1537
    %v2754 = vrot.slane %v2750, 2
    %v2755 = vrot.slane %v2751, 2
    %v2758 = vmul.f32 %v2743, %v2754
    %v2759 = vmul.f32 %v2745, %v2755
    %v2760 = vadd.f32 %v1528, %v2758
    %v2761 = vadd.f32 %v1529, %v2759
    %v2762 = vtanh.pop %v2760
    %v2763 = vtanh.pop %v2761
    %v2764 = vsub.f32 1.0, %v2747
    %v2765 = vsub.f32 1.0, %v2749
    %v2766 = vmul.f32 %v2764, %v2762
    %v2767 = vmul.f32 %v2765, %v2763
    %v2770 = vrot.slane %v2569, 7
    %v2771 = vrot.slane %v2570, 7
    %v2774 = vmul.f32 %v2747, %v2770
    %v2775 = vmul.f32 %v2749, %v2771
    %v2776 = vadd.f32 %v2766, %v2774
    %v2777 = vadd.f32 %v2767, %v2775
    %v2778 = vpack.c.bf16 %v2776, %v2776
    %v2779 = vpack.c.bf16 %v2777, %v2777
    %v2782 = vrot.slane %v2778, 3
    %v2783 = vrot.slane %v2779, 3
    %2786 = vmatprep.subr.bf16.mxu0 %v1151
    %2787 = vmatpush1.bf16.msra.mxu0 %v1150
    %2788 = vmatprep.subr.bf16.mxu0 %v1157
    %2789 = vmatpush1.bf16.msra.mxu0 %v1156
    %2790 = vmatprep.subr.bf16.mxu0 %v1163
    %2791 = vmatpush1.bf16.msra.mxu0 %v1162
    %2792 = vmatprep.subr.bf16.mxu0 %v1169
    %2793 = vmatpush1.bf16.msra.mxu0 %v1168
    %2794 = vmatprep.subr.bf16.mxu0 %v1175
    %2795 = vmatpush1.bf16.msra.mxu0 %v1174
    %2796 = vmatprep.subr.bf16.mxu0 %v1181
    %2797 = vmatpush1.bf16.msra.mxu0 %v1180
    %2798 = vmatprep.subr.bf16.mxu0 %v1187
    %2799 = vmatpush1.bf16.msra.mxu0 %v1186
    %2800 = vmatprep.subr.bf16.mxu0 %v1193
    %2801 = vmatpush1.bf16.msra.mxu0 %v1192
    %2802 = vmatprep.subr.bf16.mxu0 %v1199
    %2803 = vmatpush1.bf16.msra.mxu0 %v1198
    %2804 = vmatprep.subr.bf16.mxu0 %v1205
    %2805 = vmatpush1.bf16.msra.mxu0 %v1204
    %2806 = vmatprep.subr.bf16.mxu0 %v1211
    %2807 = vmatpush1.bf16.msra.mxu0 %v1210
    %2808 = vmatprep.subr.bf16.mxu0 %v1217
    %2809 = vmatpush1.bf16.msra.mxu0 %v1216
    %2810 = vmatprep.subr.bf16.mxu0 %v1223
    %2811 = vmatpush1.bf16.msra.mxu0 %v1222
    %2812 = vmatprep.subr.bf16.mxu0 %v1229
    %2813 = vmatpush1.bf16.msra.mxu0 %v1228
    %2814 = vmatprep.subr.bf16.mxu0 %v1235
    %2815 = vmatpush1.bf16.msra.mxu0 %v1234
    %2816 = vmatprep.subr.bf16.mxu0 %v1241
    %2817 = vmatpush1.bf16.msra.mxu0 %v1240
    %2818 = vmatprep.mubr.bf16.mxu0 %v2783
    %2819 = vmatmul.mubr.bf16.gmra.mrb[0].mxu0 %v2782
    %v2820 = vpop.f32.mrb[0].mxu0
    %v2821 = vadd.f32 0.0, %v2820
    %v2822 = vpop.f32.mrb[0].mxu0
    %v2823 = vadd.f32 0.0, %v2822
    %v2824 = vpop.f32.mrb[0].mxu0
    %v2825 = vpop.f32.mrb[0].mxu0
    %2826 = vdwg.mxu0
    %2827 = vmatprep.subr.bf16.mxu0 %v1153
    %2828 = vmatpush1.bf16.msra.mxu0 %v1152
    %2829 = vmatprep.subr.bf16.mxu0 %v1159
    %2830 = vmatpush1.bf16.msra.mxu0 %v1158
    %2831 = vmatprep.subr.bf16.mxu0 %v1165
    %2832 = vmatpush1.bf16.msra.mxu0 %v1164
    %2833 = vmatprep.subr.bf16.mxu0 %v1171
    %2834 = vmatpush1.bf16.msra.mxu0 %v1170
    %2835 = vmatprep.subr.bf16.mxu0 %v1177
    %2836 = vmatpush1.bf16.msra.mxu0 %v1176
    %2837 = vmatprep.subr.bf16.mxu0 %v1183
    %2838 = vmatpush1.bf16.msra.mxu0 %v1182
    %2839 = vmatprep.subr.bf16.mxu0 %v1189
    %2840 = vmatpush1.bf16.msra.mxu0 %v1188
    %2841 = vmatprep.subr.bf16.mxu0 %v1195
    %2842 = vmatpush1.bf16.msra.mxu0 %v1194
    %2843 = vmatprep.subr.bf16.mxu0 %v1201
    %2844 = vmatpush1.bf16.msra.mxu0 %v1200
    %2845 = vmatprep.subr.bf16.mxu0 %v1207
    %2846 = vmatpush1.bf16.msra.mxu0 %v1206
    %2847 = vmatprep.subr.bf16.mxu0 %v1213
    %2848 = vmatpush1.bf16.msra.mxu0 %v1212
    %2849 = vmatprep.subr.bf16.mxu0 %v1219
    %2850 = vmatpush1.bf16.msra.mxu0 %v1218
    %2851 = vmatprep.subr.bf16.mxu0 %v1225
    %2852 = vmatpush1.bf16.msra.mxu0 %v1224
    %2853 = vmatprep.subr.bf16.mxu0 %v1231
    %2854 = vmatpush1.bf16.msra.mxu0 %v1230
    %2855 = vmatprep.subr.bf16.mxu0 %v1237
    %2856 = vmatpush1.bf16.msra.mxu0 %v1236
    %2857 = vmatprep.subr.bf16.mxu0 %v1243
    %2858 = vmatpush1.bf16.msra.mxu0 %v1242
    %2859 = vmatprep.mubr.bf16.mxu0 %v2783
    %2860 = vmatmul.mubr.bf16.gmra.mrb[0].mxu0 %v2782
    %v2861 = vpop.f32.mrb[0].mxu0
    %v2862 = vadd.f32 0.0, %v2861
    %v2863 = vpop.f32.mrb[0].mxu0
    %v2864 = vadd.f32 0.0, %v2863
    %v2865 = vpop.f32.mrb[0].mxu0
    %v2866 = vpop.f32.mrb[0].mxu0
    %2867 = vdwg.mxu0
    %2868 = vmatprep.subr.bf16.mxu0 %v1155
    %2869 = vmatpush1.bf16.msra.mxu0 %v1154
    %2870 = vmatprep.subr.bf16.mxu0 %v1161
    %2871 = vmatpush1.bf16.msra.mxu0 %v1160
    %2872 = vmatprep.subr.bf16.mxu0 %v1167
    %2873 = vmatpush1.bf16.msra.mxu0 %v1166
    %2874 = vmatprep.subr.bf16.mxu0 %v1173
    %2875 = vmatpush1.bf16.msra.mxu0 %v1172
    %2876 = vmatprep.subr.bf16.mxu0 %v1179
    %2877 = vmatpush1.bf16.msra.mxu0 %v1178
    %2878 = vmatprep.subr.bf16.mxu0 %v1185
    %2879 = vmatpush1.bf16.msra.mxu0 %v1184
    %2880 = vmatprep.subr.bf16.mxu0 %v1191
    %2881 = vmatpush1.bf16.msra.mxu0 %v1190
    %2882 = vmatprep.subr.bf16.mxu0 %v1197
    %2883 = vmatpush1.bf16.msra.mxu0 %v1196
    %2884 = vmatprep.subr.bf16.mxu0 %v1203
    %2885 = vmatpush1.bf16.msra.mxu0 %v1202
    %2886 = vmatprep.subr.bf16.mxu0 %v1209
    %2887 = vmatpush1.bf16.msra.mxu0 %v1208
    %2888 = vmatprep.subr.bf16.mxu0 %v1215
    %2889 = vmatpush1.bf16.msra.mxu0 %v1214
    %2890 = vmatprep.subr.bf16.mxu0 %v1221
    %2891 = vmatpush1.bf16.msra.mxu0 %v1220
    %2892 = vmatprep.subr.bf16.mxu0 %v1227
    %2893 = vmatpush1.bf16.msra.mxu0 %v1226
    %2894 = vmatprep.subr.bf16.mxu0 %v1233
    %2895 = vmatpush1.bf16.msra.mxu0 %v1232
    %2896 = vmatprep.subr.bf16.mxu0 %v1239
    %2897 = vmatpush1.bf16.msra.mxu0 %v1238
    %2898 = vmatprep.subr.bf16.mxu0 %v1245
    %2899 = vmatpush1.bf16.msra.mxu0 %v1244
    %2900 = vmatprep.mubr.bf16.mxu0 %v2783
    %2901 = vmatmul.mubr.bf16.gmra.mrb[0].mxu0 %v2782
    %v2902 = vpop.f32.mrb[0].mxu0
    %v2903 = vadd.f32 0.0, %v2902
    %v2904 = vpop.f32.mrb[0].mxu0
    %v2905 = vadd.f32 0.0, %v2904
    %v2906 = vpop.f32.mrb[0].mxu0
    %v2907 = vpop.f32.mrb[0].mxu0
    %2908 = vdwg.mxu0
    %v2913 = vrot.slane %v2821, 1
    %v2914 = vrot.slane %v2823, 1
    %v2915 = vrot.slane %v2862, 1
    %v2916 = vrot.slane %v2864, 1
    %v2921 = vadd.f32 %v663, %v2913
    %v2922 = vadd.f32 %v665, %v2914
    %v2923 = vadd.f32 %v704, %v2915
    %v2924 = vadd.f32 %v706, %v2916
    %v2925 = vadd.f32 %v2921, %v1473
    %v2926 = vadd.f32 %v2922, %v1477
    %v2927 = vadd.f32 %v2923, %v1481
    %v2928 = vadd.f32 %v2924, %v1485
    %v2929 = vxor.u32 %v2925, 2147483648
    %v2930 = vxor.u32 %v2926, 2147483648
    %v2931 = vxor.u32 %v2927, 2147483648
    %v2932 = vxor.u32 %v2928, 2147483648
    %v2933 = vmul.f32 %v2929, 1.442695
    %v2934 = vpow.pop %v2933
    %v2935 = vmul.f32 %v2930, 1.442695
    %v2936 = vpow.pop %v2935
    %v2937 = vmul.f32 %v2931, 1.442695
    %v2938 = vpow.pop %v2937
    %v2939 = vmul.f32 %v2932, 1.442695
    %v2940 = vpow.pop %v2939
    %v2941 = vadd.f32 %v2934, 1.0
    %v2942 = vadd.f32 %v2936, 1.0
    %v2943 = vadd.f32 %v2938, 1.0
    %v2944 = vadd.f32 %v2940, 1.0
    %v2945 = vrcp.pop %v2941
    %v2946 = vmul.f32 1.0, %v2945
    %v2947 = vrcp.pop %v2942
    %v2948 = vmul.f32 1.0, %v2947
    %v2949 = vrcp.pop %v2943
    %v2950 = vmul.f32 1.0, %v2949
    %v2951 = vrcp.pop %v2944
    %v2952 = vmul.f32 1.0, %v2951
    %v2953 = vadd.f32 %v2903, %v1533
    %v2954 = vadd.f32 %v2905, %v1537
    %v2957 = vrot.slane %v2953, 1
    %v2958 = vrot.slane %v2954, 1
    %v2961 = vmul.f32 %v2946, %v2957
    %v2962 = vmul.f32 %v2948, %v2958
    %v2963 = vadd.f32 %v1528, %v2961
    %v2964 = vadd.f32 %v1529, %v2962
    %v2965 = vtanh.pop %v2963
    %v2966 = vtanh.pop %v2964
    %v2967 = vsub.f32 1.0, %v2950
    %v2968 = vsub.f32 1.0, %v2952
    %v2969 = vmul.f32 %v2967, %v2965
    %v2970 = vmul.f32 %v2968, %v2966
    %v2973 = vrot.slane %v2776, 7
    %v2974 = vrot.slane %v2777, 7
    %v2977 = vmul.f32 %v2950, %v2973
    %v2978 = vmul.f32 %v2952, %v2974
    %v2979 = vadd.f32 %v2969, %v2977
    %v2980 = vadd.f32 %v2970, %v2978
    %vm2981 = vcmask 1040384
    %v2982 = vsel %vm2981, %v1554, %v1751
    %v2983 = vsel %vm2981, %v1555, %v1752
    %vm2984 = vcmask 1041408
    %v2985 = vsel %vm2984, %v2982, %v1956
    %v2986 = vsel %vm2984, %v2983, %v1957
    %vm2987 = vcmask 1042432
    %v2988 = vsel %vm2987, %v2985, %v2159
    %v2989 = vsel %vm2987, %v2986, %v2160
    %vm2990 = vcmask 1043456
    %v2991 = vsel %vm2990, %v2988, %v2366
    %v2992 = vsel %vm2990, %v2989, %v2367
    %vm2993 = vcmask 1044480
    %v2994 = vsel %vm2993, %v2991, %v2569
    %v2995 = vsel %vm2993, %v2992, %v2570
    %vm2996 = vcmask 1045504
    %v2997 = vsel %vm2996, %v2994, %v2776
    %v2998 = vsel %vm2996, %v2995, %v2777
    %vm2999 = vcmask 1046528
    %v3000 = vsel %vm2999, %v2997, %v2979
    %v3001 = vsel %vm2999, %v2998, %v2980
    %3002 = vst [vmem:[%s5] sm:$0xff] %v3000
    %3003 = vst [vmem:[%s5 + $0x8] sm:$0xff] %v3001
    // Predicated region
    $region30: #{encoder_rnn_forward.1} parent=1 // pred_check
      _
    $region31: #{encoder_rnn_forward.1} parent=1 // pred_check_branch
      %3005 = sbr.rel (0) target = $region33
    $region32: #{encoder_rnn_forward.1} parent=1 // pred_region
      _
    $region33: #{encoder_rnn_forward.1} parent=1 // pred_fallthru
      _
    // Predicated region
    $region34: #{encoder_rnn_forward.1} parent=1 // pred_check
      _
    $region35: #{encoder_rnn_forward.1} parent=1 // pred_check_branch
      %3007 = sbr.rel (0) target = $region37
    $region36: #{encoder_rnn_forward.1} parent=1 // pred_region
      _
    $region37: #{encoder_rnn_forward.1} parent=1 // pred_fallthru
      _
    %3008 = vsyncpa [#allocation3], 1
    %3009 = vsyncpa [#allocation5], 1

</llo_original>
